<compile_context>
chip_gen: v7x
topology: tpu7x:2x2x1
jax: 0.10.0
libtpu: 0.0.40
codegen_flags: <defaults>
</compile_context>

<pallas_src>
import math
import numpy as np
import jax
import jax.numpy as jnp
from jax import lax
from jax.experimental import pallas as pl
from jax.experimental.pallas import tpu as pltpu

B = 2
S = 8                       # must equal NUM_HEADS (see note above)
HIDDEN = 64
NUM_HEADS = 8
D_HEAD = HIDDEN // NUM_HEADS
LN_EPS = 1e-5
SCALE = 1.0 / math.sqrt(D_HEAD)

ROWS = B * S                # 16 token rows (batch folded)
GROUPS = B * NUM_HEADS      # 16 (batch, head) groups
BIG = GROUPS * S            # 128 expanded rows / cols = (batch, head, token)
NEG_BIG = -1e30             # "minus infinity" for off-block score entries


# ----------------------------------------------------------------------------
# Kernel
# ----------------------------------------------------------------------------
def gat_kernel(x_ref, biasmat_ref, wbig_ref, pvec_ref, r_ref, rt_ref, hm_ref, bb_ref,
               out_ref, probs_ref):
    f32 = jnp.float32

    x2 = x_ref[...]                         # [ROWS, H]     token rows (b, i)
    biasmat = biasmat_ref[...]              # [8, BIG]      rows: dist | ang | ones | maskterm | 0...
    R = r_ref[...]                          # [BIG, ROWS]   replicate token rows per head (0/1)
    RT = rt_ref[...]                        # [ROWS, BIG]   fold heads back (R^T)
    hmask = hm_ref[...]                     # [BIG, H]      select the head's hidden block (0/1)
    bbias = bb_ref[...]                     # [BIG, BIG]    0 on (b,h) diagonal blocks, -1e30 off

    # pre-transposed weight slab: rows = Wq^T | (Wk^T * 1/sqrt(d)) | Wv^T | Wo^T
    wqT = wbig_ref[0 * HIDDEN:1 * HIDDEN, :]
    wkT = wbig_ref[1 * HIDDEN:2 * HIDDEN, :]
    wvT = wbig_ref[2 * HIDDEN:3 * HIDDEN, :]
    woT = wbig_ref[3 * HIDDEN:4 * HIDDEN, :]

    P = pvec_ref[...]                       # [16, H] packed small params
    wdabT = P[0:8, :]                       # rows: tiled wd | wa | (bd+ba) | zeros...
    bq, bk, bv = P[8:9, :], P[9:10, :], P[10:11, :]
    bo, gamma, beta = P[11:12, :], P[12:13, :], P[13:14, :]

    # ---- Q / K / V projections (K already carries the 1/sqrt(d) scale). ----
    q = jnp.dot(x2, wqT, preferred_element_type=f32) + bq
    k = jnp.dot(x2, wkT, preferred_element_type=f32) + bk
    v = jnp.dot(x2, wvT, preferred_element_type=f32) + bv

    # replicate token rows across heads, mask queries/values to their own head block
    qw = jnp.dot(R, q, preferred_element_type=f32)          # [BIG, H]
    kw = jnp.dot(R, k, preferred_element_type=f32)          # [BIG, H]
    vw = jnp.dot(R, v, preferred_element_type=f32)          # [BIG, H]
    qm = qw * hmask
    vm = vw * hmask

    dn_nt = (((1,), (1,)), ((), ()))                        # contract last dims (A @ B^T)

    # all-head (scaled) scores in one matmul; only (b,h) diagonal blocks are meaningful
    scores = lax.dot_general(qm, kw, dn_nt, preferred_element_type=f32)     # [BIG, BIG]

    # distance / angle / key-mask biases for all heads via ONE small MXU matmul:
    #   A = [q.wd | q.wa | q.(bd+ba) | 1 | 0...]  ([BIG, 8])
    #   bias = A @ [dist ; ang ; ones ; (1-mask)*-1e4 ; 0...]  ([8, BIG])
    qb = lax.dot_general(qm, wdabT, dn_nt, preferred_element_type=f32)      # [BIG, 8]
    e3 = jnp.where(lax.broadcasted_iota(jnp.int32, (1, 8), 1) == 3,
                   jnp.float32(1.0), jnp.float32(0.0))                      # constant column
    A = qb + e3
    scores = scores + jnp.dot(A, biasmat, preferred_element_type=f32) + bbias

    # one lane-dense softmax over all 128 key columns (off-block entries underflow to 0)
    m = jnp.max(scores, axis=-1, keepdims=True)
    e = jnp.exp(scores - m)
    p = e / jnp.sum(e, axis=-1, keepdims=True)
    probs_ref[...] = p                                       # [128, 128] dense store

    # context for all heads, then fold heads back into [ROWS, H]
    ctx_wide = jnp.dot(p, vm, preferred_element_type=f32)                   # [BIG, H]
    ctx = jnp.dot(RT, ctx_wide, preferred_element_type=f32)                 # [ROWS, H]

    out = jnp.dot(ctx, woT, preferred_element_type=f32) + bo
    # TODO(synk): attention_dropout / output_dropout are identity (eval mode).

    # residual + LayerNorm
    y = out + x2
    mu = jnp.mean(y, axis=-1, keepdims=True)
    var = jnp.mean((y - mu) ** 2, axis=-1, keepdims=True)
    y = (y - mu) * lax.rsqrt(var + LN_EPS)
    out_ref[...] = y * gamma + beta


# ----------------------------------------------------------------------------
# One-time parameter / constant packing (hoisted out of the per-call path)
# ----------------------------------------------------------------------------
def _static_masks():
    """Compile-time-constant bookkeeping matrices, built with numpy."""
    r = np.arange(BIG)
    b_r = r // (NUM_HEADS * S)
    h_r = (r // S) % NUM_HEADS
    t_r = r % S
    c16 = np.arange(ROWS)
    # R[(b,h,i), (b',i')] = 1 iff b==b' and i==i'   (replicate each token row per head)
    R = ((b_r[:, None] == c16[None, :] // S) &
         (t_r[:, None] == c16[None, :] % S)).astype(np.float32)             # [BIG, ROWS]
    hcols = np.arange(HIDDEN)
    hmask = (h_r[:, None] == hcols[None, :] // D_HEAD).astype(np.float32)   # [BIG, HIDDEN]
    grp = r // S
    bbias = np.where(grp[:, None] == grp[None, :], 0.0, NEG_BIG).astype(np.float32)  # [BIG, BIG]
    return R, np.ascontiguousarray(R.T), hmask, bbias


def pack_params(params):
    """Call ONCE per parameter set; returns device-resident packed inputs."""
    wbig = jnp.concatenate([params["wq"].T, params["wk"].T * SCALE,
                            params["wv"].T, params["wo"].T], axis=0)        # [4H, H]
    tile = lambda w: jnp.tile(w[0], NUM_HEADS)                              # [D] -> [H]
    z = jnp.zeros((HIDDEN,), jnp.float32)
    pvec = jnp.stack([tile(params["wd"]), tile(params["wa"]),
                      tile(params["bd"]) + tile(params["ba"]),
                      z, z, z, z, z,
                      params["bq"][0], params["bk"][0] * SCALE, params["bv"][0],
                      params["bo"][0], params["gamma"][0], params["beta"][0],
                      z, z], axis=0)                                        # [16, H]
    R, RT, hmask, bbias = (jnp.asarray(a) for a in _static_masks())
    return {"wbig": wbig, "pvec": pvec, "R": R, "RT": RT, "hmask": hmask, "bbias": bbias}


# ----------------------------------------------------------------------------
# Forward wrapper
# ----------------------------------------------------------------------------
@jax.jit
def graph_attention_forward(x, dist, ang, mask, packed):
    """x: [B,S,H], dist/ang: [B,S,S], mask: [B,1,S] key mask (1=keep, 0=mask)."""
    # per-call layout plumbing only (no parameter packing here)
    x2 = x.reshape(ROWS, HIDDEN)
    dist_row = dist.reshape(BIG)
    ang_row = ang.reshape(BIG)
    mask_row = jnp.broadcast_to(mask, (B, NUM_HEADS, S)).reshape(BIG)
    z = jnp.zeros((BIG,), jnp.float32)
    biasmat = jnp.stack([dist_row, ang_row, jnp.ones((BIG,), jnp.float32),
                         (1.0 - mask_row) * -10000.0, z, z, z, z], axis=0)  # [8, BIG]

    full = lambda shape: pl.BlockSpec(shape, lambda i: (0, 0))
    out2, probs_full = pl.pallas_call(
        gat_kernel,
        grid=(1,),   # whole batch in one step; on v7x a grid=(B,) "parallel" split is an option
        in_specs=[
            full((ROWS, HIDDEN)),            # x2
            full((8, BIG)),                  # biasmat
            full((4 * HIDDEN, HIDDEN)),      # wbig
            full((16, HIDDEN)),              # pvec
            full((BIG, ROWS)),               # R
            full((ROWS, BIG)),               # RT
            full((BIG, HIDDEN)),             # hmask
            full((BIG, BIG)),                # block bias
        ],
        out_specs=(full((ROWS, HIDDEN)), full((BIG, BIG))),
        out_shape=(jax.ShapeDtypeStruct((ROWS, HIDDEN), jnp.float32),
                   jax.ShapeDtypeStruct((BIG, BIG), jnp.float32)),
        compiler_params=pltpu.CompilerParams(dimension_semantics=("arbitrary",)),
    )(x2, biasmat, packed["wbig"], packed["pvec"], packed["R"], packed["RT"],
      packed["hmask"], packed["bbias"])

    out = out2.reshape(B, S, HIDDEN)
    # gather-free extraction of the (batch, head) diagonal blocks
    pf = probs_full.reshape(GROUPS, S, GROUPS, S)
    eye = jnp.eye(GROUPS, dtype=probs_full.dtype)
    probs = jnp.einsum("gihj,gh->gij", pf, eye).reshape(B, NUM_HEADS, S, S)
    return out, probs


# ----------------------------------------------------------------------------
# Pure-JAX reference (mirrors the PyTorch forward in eval mode)
# ----------------------------------------------------------------------------
def reference_forward(x, dist, ang, mask2d, params):
    def linear(t, w, b):
        return t @ w.T + b

    q = linear(x, params["wq"], params["bq"])
    k = linear(x, params["wk"], params["bk"])
    v = linear(x, params["wv"], params["bv"])

    def split(t):
        return t.reshape(B, S, NUM_HEADS, D_HEAD).transpose(0, 2, 1, 3)

    Q, K, V = split(q), split(k), split(v)
    scores = jnp.einsum("bhid,bhjd->bhij", Q, K) / math.sqrt(D_HEAD)

    dist_emb = dist[..., None] * params["wd"][0] + params["bd"][0]   # [B,S,S,d]
    scores = scores + jnp.einsum("bhid,bhjd->bhij", Q, dist_emb)
    ang_emb = ang[..., None] * params["wa"][0] + params["ba"][0]
    scores = scores + jnp.einsum("bhid,bhjd->bhij", Q, ang_emb)

    scores = scores + (1.0 - mask2d)[:, None, None, :] * -10000.0
    probs = jax.nn.softmax(scores, axis=-1)
    ctx = jnp.einsum("bhij,bhjd->bhid", probs, V)
    ctx = ctx.transpose(0, 2, 1, 3).reshape(B, S, HIDDEN)
    out = linear(ctx, params["wo"], params["bo"])
    y = out + x
    mu = y.mean(-1, keepdims=True)
    var = ((y - mu) ** 2).mean(-1, keepdims=True)
    y = (y - mu) / jnp.sqrt(var + LN_EPS)
    y = y * params["gamma"][0] + params["beta"][0]
    return y, probs


def init_params(key):
    """Deterministic parameter init (PyTorch Linear-style uniform)."""
    ks = jax.random.split(key, 12)
    bound_h = 1.0 / math.sqrt(HIDDEN)
    bound_1 = 1.0                                   # Linear(1, d): fan_in = 1
    u = lambda k, shape, b: jax.random.uniform(k, shape, jnp.float32, -b, b)
    return {
        "wq": u(ks[0], (HIDDEN, HIDDEN), bound_h), "bq": u(ks[1], (1, HIDDEN), bound_h),
        "wk": u(ks[2], (HIDDEN, HIDDEN), bound_h), "bk": u(ks[3], (1, HIDDEN), bound_h),
        "wv": u(ks[4], (HIDDEN, HIDDEN), bound_h), "bv": u(ks[5], (1, HIDDEN), bound_h),
        "wd": u(ks[6], (1, D_HEAD), bound_1),      "bd": u(ks[7], (1, D_HEAD), bound_1),
        "wa": u(ks[8], (1, D_HEAD), bound_1),      "ba": u(ks[9], (1, D_HEAD), bound_1),
        "wo": u(ks[10], (HIDDEN, HIDDEN), bound_h), "bo": u(ks[11], (1, HIDDEN), bound_h),
        "gamma": jnp.ones((1, HIDDEN), jnp.float32),
        "beta": jnp.zeros((1, HIDDEN), jnp.float32),
    }


if __name__ == "__main__":
    key = jax.random.PRNGKey(0)
    kx, kd, ka, kp = jax.random.split(key, 4)

    x = jax.random.normal(kx, (B, S, HIDDEN), jnp.float32)
    dist = jnp.abs(jax.random.normal(kd, (B, S, S), jnp.float32))
    dist = 0.5 * (dist + dist.transpose(0, 2, 1))                  # symmetric distances
    ang = jax.random.uniform(ka, (B, S, S), jnp.float32, -math.pi, math.pi)
    mask2d = jnp.ones((B, S), jnp.float32).at[1, -2:].set(0.0)     # mask 2 keys in batch 1
    mask = mask2d[:, None, :]                                      # [B, 1, S] key mask

    params = init_params(kp)
    packed = pack_params(params)                                   # hoisted, done once

    out, probs = graph_attention_forward(x, dist, ang, mask, packed)
    out = jax.block_until_ready(out)
    probs = jax.block_until_ready(probs)

    ref_out, ref_probs = reference_forward(x, dist, ang, mask2d, params)

    assert out.shape == (B, S, HIDDEN) and probs.shape == (B, NUM_HEADS, S, S)
    assert jnp.max(jnp.abs(out - ref_out)) < 2e-4, "output mismatch"
    assert jnp.max(jnp.abs(probs - ref_probs)) < 3e-5, "attention probs mismatch"

    print("KERNEL_OK")
</pallas_src>

<mosaic_0001>
module attributes {stable_mosaic.version = 11 : i64} {
  func.func @gat_kernel(%arg0: i32, %arg1: memref<16x64xf32, #tpu.memory_space<vmem>>, %arg2: memref<8x128xf32, #tpu.memory_space<vmem>>, %arg3: memref<256x64xf32, #tpu.memory_space<vmem>>, %arg4: memref<16x64xf32, #tpu.memory_space<vmem>>, %arg5: memref<128x16xf32, #tpu.memory_space<vmem>>, %arg6: memref<16x128xf32, #tpu.memory_space<vmem>>, %arg7: memref<128x64xf32, #tpu.memory_space<vmem>>, %arg8: memref<128x128xf32, #tpu.memory_space<vmem>>, %arg9: memref<16x64xf32, #tpu.memory_space<vmem>>, %arg10: memref<128x128xf32, #tpu.memory_space<vmem>>) attributes {dimension_semantics = [#tpu.dimension_semantics<arbitrary>], iteration_bounds = array<i64: 1>, scalar_prefetch = 0 : i64, scratch_operands = 0 : i64, tpu.core_type = #tpu.core_type<tc>, window_params = [{pipeline_mode = #tpu.pipeline_mode<synchronous>, transform_indices = @transform_0, window_bounds = array<i64: 16, 64>}, {pipeline_mode = #tpu.pipeline_mode<synchronous>, transform_indices = @transform_1, window_bounds = array<i64: 8, 128>}, {pipeline_mode = #tpu.pipeline_mode<synchronous>, transform_indices = @transform_2, window_bounds = array<i64: 256, 64>}, {pipeline_mode = #tpu.pipeline_mode<synchronous>, transform_indices = @transform_3, window_bounds = array<i64: 16, 64>}, {pipeline_mode = #tpu.pipeline_mode<synchronous>, transform_indices = @transform_4, window_bounds = array<i64: 128, 16>}, {pipeline_mode = #tpu.pipeline_mode<synchronous>, transform_indices = @transform_5, window_bounds = array<i64: 16, 128>}, {pipeline_mode = #tpu.pipeline_mode<synchronous>, transform_indices = @transform_6, window_bounds = array<i64: 128, 64>}, {pipeline_mode = #tpu.pipeline_mode<synchronous>, transform_indices = @transform_7, window_bounds = array<i64: 128, 128>}, {pipeline_mode = #tpu.pipeline_mode<synchronous>, transform_indices = @transform_8, window_bounds = array<i64: 16, 64>}, {pipeline_mode = #tpu.pipeline_mode<synchronous>, transform_indices = @transform_9, window_bounds = array<i64: 128, 128>}]} {
    %c0 = arith.constant 0 : index
    %c0_0 = arith.constant 0 : index
    %0 = vector.load %arg1[%c0, %c0_0] : memref<16x64xf32, #tpu.memory_space<vmem>>, vector<16x64xf32>
    %c0_1 = arith.constant 0 : index
    %c0_2 = arith.constant 0 : index
    %1 = vector.load %arg2[%c0_1, %c0_2] : memref<8x128xf32, #tpu.memory_space<vmem>>, vector<8x128xf32>
    %c0_3 = arith.constant 0 : index
    %c0_4 = arith.constant 0 : index
    %2 = vector.load %arg5[%c0_3, %c0_4] : memref<128x16xf32, #tpu.memory_space<vmem>>, vector<128x16xf32>
    %c0_5 = arith.constant 0 : index
    %c0_6 = arith.constant 0 : index
    %3 = vector.load %arg6[%c0_5, %c0_6] : memref<16x128xf32, #tpu.memory_space<vmem>>, vector<16x128xf32>
    %c0_7 = arith.constant 0 : index
    %c0_8 = arith.constant 0 : index
    %4 = vector.load %arg7[%c0_7, %c0_8] : memref<128x64xf32, #tpu.memory_space<vmem>>, vector<128x64xf32>
    %c0_9 = arith.constant 0 : index
    %c0_10 = arith.constant 0 : index
    %5 = vector.load %arg8[%c0_9, %c0_10] : memref<128x128xf32, #tpu.memory_space<vmem>>, vector<128x128xf32>
    %c0_11 = arith.constant 0 : index
    %c0_12 = arith.constant 0 : index
    %6 = vector.load %arg3[%c0_11, %c0_12] : memref<256x64xf32, #tpu.memory_space<vmem>>, vector<64x64xf32>
    %c64 = arith.constant 64 : index
    %c0_13 = arith.constant 0 : index
    %7 = vector.load %arg3[%c64, %c0_13] : memref<256x64xf32, #tpu.memory_space<vmem>>, vector<64x64xf32>
    %c128 = arith.constant 128 : index
    %c0_14 = arith.constant 0 : index
    %8 = vector.load %arg3[%c128, %c0_14] : memref<256x64xf32, #tpu.memory_space<vmem>>, vector<64x64xf32>
    %c192 = arith.constant 192 : index
    %c0_15 = arith.constant 0 : index
    %9 = vector.load %arg3[%c192, %c0_15] : memref<256x64xf32, #tpu.memory_space<vmem>>, vector<64x64xf32>
    %c0_16 = arith.constant 0 : index
    %c0_17 = arith.constant 0 : index
    %10 = vector.load %arg4[%c0_16, %c0_17] : memref<16x64xf32, #tpu.memory_space<vmem>>, vector<16x64xf32>
    %11 = vector.extract_strided_slice %10 {offsets = [0, 0], sizes = [8, 64], strides = [1, 1]} : vector<16x64xf32> to vector<8x64xf32>
    %12 = vector.extract_strided_slice %10 {offsets = [8, 0], sizes = [1, 64], strides = [1, 1]} : vector<16x64xf32> to vector<1x64xf32>
    %13 = vector.extract_strided_slice %10 {offsets = [9, 0], sizes = [1, 64], strides = [1, 1]} : vector<16x64xf32> to vector<1x64xf32>
    %14 = vector.extract_strided_slice %10 {offsets = [10, 0], sizes = [1, 64], strides = [1, 1]} : vector<16x64xf32> to vector<1x64xf32>
    %15 = vector.extract_strided_slice %10 {offsets = [11, 0], sizes = [1, 64], strides = [1, 1]} : vector<16x64xf32> to vector<1x64xf32>
    %16 = vector.extract_strided_slice %10 {offsets = [12, 0], sizes = [1, 64], strides = [1, 1]} : vector<16x64xf32> to vector<1x64xf32>
    %17 = vector.extract_strided_slice %10 {offsets = [13, 0], sizes = [1, 64], strides = [1, 1]} : vector<16x64xf32> to vector<1x64xf32>
    %cst = arith.constant dense<0.000000e+00> : vector<16x64xf32>
    %18 = tpu.matmul %0, %6, %cst {dimension_numbers = #tpu.dot_dimension_numbers<[1], [0], [0], [1], [0, 0, 1, 1], [], []>} : vector<16x64xf32>, vector<64x64xf32>, vector<16x64xf32> -> vector<16x64xf32>
    %19 = vector.broadcast %12 : vector<1x64xf32> to vector<16x64xf32>
    %20 = arith.addf %18, %19 : vector<16x64xf32>
    %cst_18 = arith.constant dense<0.000000e+00> : vector<16x64xf32>
    %21 = tpu.matmul %0, %7, %cst_18 {dimension_numbers = #tpu.dot_dimension_numbers<[1], [0], [0], [1], [0, 0, 1, 1], [], []>} : vector<16x64xf32>, vector<64x64xf32>, vector<16x64xf32> -> vector<16x64xf32>
    %22 = vector.broadcast %13 : vector<1x64xf32> to vector<16x64xf32>
    %23 = arith.addf %21, %22 : vector<16x64xf32>
    %cst_19 = arith.constant dense<0.000000e+00> : vector<16x64xf32>
    %24 = tpu.matmul %0, %8, %cst_19 {dimension_numbers = #tpu.dot_dimension_numbers<[1], [0], [0], [1], [0, 0, 1, 1], [], []>} : vector<16x64xf32>, vector<64x64xf32>, vector<16x64xf32> -> vector<16x64xf32>
    %25 = vector.broadcast %14 : vector<1x64xf32> to vector<16x64xf32>
    %26 = arith.addf %24, %25 : vector<16x64xf32>
    %cst_20 = arith.constant dense<0.000000e+00> : vector<128x64xf32>
    %27 = tpu.matmul %2, %20, %cst_20 {dimension_numbers = #tpu.dot_dimension_numbers<[1], [0], [0], [1], [0, 0, 1, 1], [], []>} : vector<128x16xf32>, vector<16x64xf32>, vector<128x64xf32> -> vector<128x64xf32>
    %cst_21 = arith.constant dense<0.000000e+00> : vector<128x64xf32>
    %28 = tpu.matmul %2, %23, %cst_21 {dimension_numbers = #tpu.dot_dimension_numbers<[1], [0], [0], [1], [0, 0, 1, 1], [], []>} : vector<128x16xf32>, vector<16x64xf32>, vector<128x64xf32> -> vector<128x64xf32>
    %cst_22 = arith.constant dense<0.000000e+00> : vector<128x64xf32>
    %29 = tpu.matmul %2, %26, %cst_22 {dimension_numbers = #tpu.dot_dimension_numbers<[1], [0], [0], [1], [0, 0, 1, 1], [], []>} : vector<128x16xf32>, vector<16x64xf32>, vector<128x64xf32> -> vector<128x64xf32>
    %30 = arith.mulf %27, %4 : vector<128x64xf32>
    %31 = arith.mulf %29, %4 : vector<128x64xf32>
    %cst_23 = arith.constant dense<0.000000e+00> : vector<128x128xf32>
    %32 = tpu.matmul %30, %28, %cst_23 {dimension_numbers = #tpu.dot_dimension_numbers<[1], [1], [0], [0], [0, 0, 1, 0], [], []>} : vector<128x64xf32>, vector<128x64xf32>, vector<128x128xf32> -> vector<128x128xf32>
    %cst_24 = arith.constant dense<0.000000e+00> : vector<128x8xf32>
    %33 = tpu.matmul %30, %11, %cst_24 {dimension_numbers = #tpu.dot_dimension_numbers<[1], [1], [0], [0], [0, 0, 1, 0], [], []>} : vector<128x64xf32>, vector<8x64xf32>, vector<128x8xf32> -> vector<128x8xf32>
    %34 = tpu.iota {dimensions = array<i32: 1>} : vector<1x8xi32>
    %c3_i32 = arith.constant 3 : i32
    %35 = vector.broadcast %c3_i32 : i32 to vector<1x8xi32>
    %36 = arith.cmpi eq, %34, %35 : vector<1x8xi32>
    %cst_25 = arith.constant 1.000000e+00 : f32
    %cst_26 = arith.constant 0.000000e+00 : f32
    %37 = vector.broadcast %cst_25 : f32 to vector<1x8xf32>
    %38 = vector.broadcast %cst_26 : f32 to vector<1x8xf32>
    %39 = arith.select %36, %37, %38 : vector<1x8xi1>, vector<1x8xf32>
    %40 = vector.broadcast %39 : vector<1x8xf32> to vector<128x8xf32>
    %41 = arith.addf %33, %40 : vector<128x8xf32>
    %cst_27 = arith.constant dense<0.000000e+00> : vector<128x128xf32>
    %42 = tpu.matmul %41, %1, %cst_27 {dimension_numbers = #tpu.dot_dimension_numbers<[1], [0], [0], [1], [0, 0, 1, 1], [], []>} : vector<128x8xf32>, vector<8x128xf32>, vector<128x128xf32> -> vector<128x128xf32>
    %43 = arith.addf %32, %42 : vector<128x128xf32>
    %44 = arith.addf %43, %5 : vector<128x128xf32>
    %cst_28 = arith.constant dense<0xFF800000> : vector<128xf32>
    %45 = vector.multi_reduction <maximumf>, %44, %cst_28 [1] : vector<128x128xf32> to vector<128xf32>
    %46 = vector.shape_cast %45 : vector<128xf32> to vector<128x1xf32>
    %47 = vector.broadcast %46 : vector<128x1xf32> to vector<128x128xf32>
    %48 = arith.subf %44, %47 : vector<128x128xf32>
    %49 = math.exp %48 : vector<128x128xf32>
    %cst_29 = arith.constant dense<0.000000e+00> : vector<128xf32>
    %50 = vector.multi_reduction <add>, %49, %cst_29 [1] : vector<128x128xf32> to vector<128xf32>
    %51 = vector.shape_cast %50 : vector<128xf32> to vector<128x1xf32>
    %52 = vector.broadcast %51 : vector<128x1xf32> to vector<128x128xf32>
    %53 = arith.divf %49, %52 : vector<128x128xf32>
    %c0_30 = arith.constant 0 : index
    %c0_31 = arith.constant 0 : index
    %54 = vector.load %arg10[%c0_30, %c0_31] : memref<128x128xf32, #tpu.memory_space<vmem>>, vector<128x128xf32>
    tpu.vector_store %arg10[%c0_30, %c0_31], %53 {strides = array<i32>} : memref<128x128xf32, #tpu.memory_space<vmem>>, vector<128x128xf32>,
    %cst_32 = arith.constant dense<0.000000e+00> : vector<128x64xf32>
    %55 = tpu.matmul %53, %31, %cst_32 {dimension_numbers = #tpu.dot_dimension_numbers<[1], [0], [0], [1], [0, 0, 1, 1], [], []>} : vector<128x128xf32>, vector<128x64xf32>, vector<128x64xf32> -> vector<128x64xf32>
    %cst_33 = arith.constant dense<0.000000e+00> : vector<16x64xf32>
    %56 = tpu.matmul %3, %55, %cst_33 {dimension_numbers = #tpu.dot_dimension_numbers<[1], [0], [0], [1], [0, 0, 1, 1], [], []>} : vector<16x128xf32>, vector<128x64xf32>, vector<16x64xf32> -> vector<16x64xf32>
    %cst_34 = arith.constant dense<0.000000e+00> : vector<16x64xf32>
    %57 = tpu.matmul %56, %9, %cst_34 {dimension_numbers = #tpu.dot_dimension_numbers<[1], [0], [0], [1], [0, 0, 1, 1], [], []>} : vector<16x64xf32>, vector<64x64xf32>, vector<16x64xf32> -> vector<16x64xf32>
    %58 = vector.broadcast %15 : vector<1x64xf32> to vector<16x64xf32>
    %59 = arith.addf %57, %58 : vector<16x64xf32>
    %60 = arith.addf %59, %0 : vector<16x64xf32>
    %cst_35 = arith.constant dense<0.000000e+00> : vector<16xf32>
    %61 = vector.multi_reduction <add>, %60, %cst_35 [1] : vector<16x64xf32> to vector<16xf32>
    %62 = vector.shape_cast %61 : vector<16xf32> to vector<16x1xf32>
    %cst_36 = arith.constant 6.400000e+01 : f32
    %63 = vector.broadcast %cst_36 : f32 to vector<16x1xf32>
    %64 = arith.divf %62, %63 : vector<16x1xf32>
    %65 = vector.broadcast %64 : vector<16x1xf32> to vector<16x64xf32>
    %66 = arith.subf %60, %65 : vector<16x64xf32>
    %67 = arith.mulf %66, %66 : vector<16x64xf32>
    %cst_37 = arith.constant dense<0.000000e+00> : vector<16xf32>
    %68 = vector.multi_reduction <add>, %67, %cst_37 [1] : vector<16x64xf32> to vector<16xf32>
    %69 = vector.shape_cast %68 : vector<16xf32> to vector<16x1xf32>
    %cst_38 = arith.constant 6.400000e+01 : f32
    %70 = vector.broadcast %cst_38 : f32 to vector<16x1xf32>
    %71 = arith.divf %69, %70 : vector<16x1xf32>
    %72 = vector.broadcast %64 : vector<16x1xf32> to vector<16x64xf32>
    %73 = arith.subf %60, %72 : vector<16x64xf32>
    %cst_39 = arith.constant 9.99999974E-6 : f32
    %74 = vector.broadcast %cst_39 : f32 to vector<16x1xf32>
    %75 = arith.addf %71, %74 : vector<16x1xf32>
    %76 = math.rsqrt %75 : vector<16x1xf32>
    %77 = vector.broadcast %76 : vector<16x1xf32> to vector<16x64xf32>
    %78 = arith.mulf %73, %77 : vector<16x64xf32>
    %79 = vector.broadcast %16 : vector<1x64xf32> to vector<16x64xf32>
    %80 = arith.mulf %78, %79 : vector<16x64xf32>
    %81 = vector.broadcast %17 : vector<1x64xf32> to vector<16x64xf32>
    %82 = arith.addf %80, %81 : vector<16x64xf32>
    %c0_40 = arith.constant 0 : index
    %c0_41 = arith.constant 0 : index
    %83 = vector.load %arg9[%c0_40, %c0_41] : memref<16x64xf32, #tpu.memory_space<vmem>>, vector<16x64xf32>
    tpu.vector_store %arg9[%c0_40, %c0_41], %82 {strides = array<i32>} : memref<16x64xf32, #tpu.memory_space<vmem>>, vector<16x64xf32>,
    return
  }
  func.func @transform_0(%arg0: i32) -> (i32, i32) {
    %c0_i32 = arith.constant 0 : i32
    %c0_i32_0 = arith.constant 0 : i32
    %c0_i32_1 = arith.constant 0 : i32
    return %c0_i32, %c0_i32_0 : i32, i32
  }
  func.func @transform_1(%arg0: i32) -> (i32, i32) {
    %c0_i32 = arith.constant 0 : i32
    %c0_i32_0 = arith.constant 0 : i32
    %c0_i32_1 = arith.constant 0 : i32
    return %c0_i32, %c0_i32_0 : i32, i32
  }
  func.func @transform_2(%arg0: i32) -> (i32, i32) {
    %c0_i32 = arith.constant 0 : i32
    %c0_i32_0 = arith.constant 0 : i32
    %c0_i32_1 = arith.constant 0 : i32
    return %c0_i32, %c0_i32_0 : i32, i32
  }
  func.func @transform_3(%arg0: i32) -> (i32, i32) {
    %c0_i32 = arith.constant 0 : i32
    %c0_i32_0 = arith.constant 0 : i32
    %c0_i32_1 = arith.constant 0 : i32
    return %c0_i32, %c0_i32_0 : i32, i32
  }
  func.func @transform_4(%arg0: i32) -> (i32, i32) {
    %c0_i32 = arith.constant 0 : i32
    %c0_i32_0 = arith.constant 0 : i32
    %c0_i32_1 = arith.constant 0 : i32
    return %c0_i32, %c0_i32_0 : i32, i32
  }
  func.func @transform_5(%arg0: i32) -> (i32, i32) {
    %c0_i32 = arith.constant 0 : i32
    %c0_i32_0 = arith.constant 0 : i32
    %c0_i32_1 = arith.constant 0 : i32
    return %c0_i32, %c0_i32_0 : i32, i32
  }
  func.func @transform_6(%arg0: i32) -> (i32, i32) {
    %c0_i32 = arith.constant 0 : i32
    %c0_i32_0 = arith.constant 0 : i32
    %c0_i32_1 = arith.constant 0 : i32
    return %c0_i32, %c0_i32_0 : i32, i32
  }
  func.func @transform_7(%arg0: i32) -> (i32, i32) {
    %c0_i32 = arith.constant 0 : i32
    %c0_i32_0 = arith.constant 0 : i32
    %c0_i32_1 = arith.constant 0 : i32
    return %c0_i32, %c0_i32_0 : i32, i32
  }
  func.func @transform_8(%arg0: i32) -> (i32, i32) {
    %c0_i32 = arith.constant 0 : i32
    %c0_i32_0 = arith.constant 0 : i32
    %c0_i32_1 = arith.constant 0 : i32
    return %c0_i32, %c0_i32_0 : i32, i32
  }
  func.func @transform_9(%arg0: i32) -> (i32, i32) {
    %c0_i32 = arith.constant 0 : i32
    %c0_i32_0 = arith.constant 0 : i32
    %c0_i32_1 = arith.constant 0 : i32
    return %c0_i32, %c0_i32_0 : i32, i32
  }
}

</mosaic_0001>

<llo_original>
// kernel: graph_attention_forward.1
$region0: #{graph_attention_forward.1}
  #allocation0 [shape = 'u32[]', space=smem, size = 0x4, offset = 0x4, fixed_abs, tag = 'smem constant byte address 0x4 - core index']
  #allocation1 [shape = 'u32[144,128]{1,0:T(1,128)}', space=vmem, size = 0x12000, scoped, tag = 'internal scratch']
  %s0 = inlined_call_operand.vmem [shape: f32[16,64], index: 0, kind: input, shape index: {}]
  %s1 = inlined_call_operand.vmem [shape: f32[8,128], index: 1, kind: input, shape index: {}]
  %s2 = inlined_call_operand.vmem [shape: f32[256,64], index: 2, kind: input, shape index: {}]
  %s3 = inlined_call_operand.vmem [shape: f32[16,64], index: 3, kind: input, shape index: {}]
  %s4 = inlined_call_operand.vmem [shape: f32[128,16], index: 4, kind: input, shape index: {}]
  %s5 = inlined_call_operand.vmem [shape: f32[16,128], index: 5, kind: input, shape index: {}]
  %s6 = inlined_call_operand.vmem [shape: f32[128,64], index: 6, kind: input, shape index: {}]
  %s7 = inlined_call_operand.vmem [shape: f32[128,128], index: 7, kind: input, shape index: {}]
  %s8 = inlined_call_operand.hbm [shape: f32[16,64], index: 8, kind: output, shape index: {0}]
  %s9 = inlined_call_operand.vmem [shape: f32[128,128], index: 9, kind: output, shape index: {1}]
  %10 = xla_tuple %s8, %s9
  %s11 = sld [smem:[#allocation0]]
  $region50: #{graph_attention_forward.1} parent=0
    _
  %s13 = ssub.s32 1, %s11
  %s14 = scalar_select 0, %s13, %s11
  $region1: #{graph_attention_forward.1} parent=0
    #allocation2 [shape = 'u8[8192]{0}', space=vmem, size = 0x2000, scoped, tag = 'output window, operand 0, single buffered']
    #allocation3 [shape = 's32[1]{0}', space=sflag, size = 0x4, scoped, tag = 'scoped memory for graph_attention_forward.1']
    %15 = vsyncpa [#allocation3], 0
    // Predicated region
    $region2: #{graph_attention_forward.1} parent=1 // pred_check
      _
    $region3: #{graph_attention_forward.1} parent=1 // pred_check_branch
      %17 = sbr.rel (0) target = $region5
    $region4: #{graph_attention_forward.1} parent=1 // pred_region
      _
    $region5: #{graph_attention_forward.1} parent=1 // pred_fallthru
      _
    // Predicated region
    $region6: #{graph_attention_forward.1} parent=1 // pred_check
      _
    $region7: #{graph_attention_forward.1} parent=1 // pred_check_branch
      %19 = sbr.rel (0) target = $region9
    $region8: #{graph_attention_forward.1} parent=1 // pred_region
      _
    $region9: #{graph_attention_forward.1} parent=1 // pred_fallthru
      _
    // Predicated region
    $region10: #{graph_attention_forward.1} parent=1 // pred_check
      _
    $region11: #{graph_attention_forward.1} parent=1 // pred_check_branch
      %21 = sbr.rel (0) target = $region13
    $region12: #{graph_attention_forward.1} parent=1 // pred_region
      _
    $region13: #{graph_attention_forward.1} parent=1 // pred_fallthru
      _
    // Predicated region
    $region14: #{graph_attention_forward.1} parent=1 // pred_check
      _
    $region15: #{graph_attention_forward.1} parent=1 // pred_check_branch
      %23 = sbr.rel (0) target = $region17
    $region16: #{graph_attention_forward.1} parent=1 // pred_region
      _
    $region17: #{graph_attention_forward.1} parent=1 // pred_fallthru
      _
    // Predicated region
    $region18: #{graph_attention_forward.1} parent=1 // pred_check
      _
    $region19: #{graph_attention_forward.1} parent=1 // pred_check_branch
      %25 = sbr.rel (0) target = $region21
    $region20: #{graph_attention_forward.1} parent=1 // pred_region
      _
    $region21: #{graph_attention_forward.1} parent=1 // pred_fallthru
      _
    // Predicated region
    $region22: #{graph_attention_forward.1} parent=1 // pred_check
      _
    $region23: #{graph_attention_forward.1} parent=1 // pred_check_branch
      %27 = sbr.rel (0) target = $region25
    $region24: #{graph_attention_forward.1} parent=1 // pred_region
      _
    $region25: #{graph_attention_forward.1} parent=1 // pred_fallthru
      _
    // Predicated region
    $region26: #{graph_attention_forward.1} parent=1 // pred_check
      _
    $region27: #{graph_attention_forward.1} parent=1 // pred_check_branch
      %29 = sbr.rel (0) target = $region29
    $region28: #{graph_attention_forward.1} parent=1 // pred_region
      _
    $region29: #{graph_attention_forward.1} parent=1 // pred_fallthru
      _
    // Predicated region
    $region30: #{graph_attention_forward.1} parent=1 // pred_check
      _
    $region31: #{graph_attention_forward.1} parent=1 // pred_check_branch
      %31 = sbr.rel (0) target = $region33
    $region32: #{graph_attention_forward.1} parent=1 // pred_region
      _
    $region33: #{graph_attention_forward.1} parent=1 // pred_fallthru
      _
    %v32 = vld [vmem:[%s0] sm:$0xff]
    %v33 = vld [vmem:[%s0 + $0x8] sm:$0xff]
    %v34 = vld [vmem:[%s1] sm:$0xff]
    %v35 = vld [vmem:[%s4] sm:$0xff]
    %v36 = vld [vmem:[%s4 + $0x8] sm:$0xff]
    %v37 = vld [vmem:[%s4 + $0x10] sm:$0xff]
    %v38 = vld [vmem:[%s4 + $0x18] sm:$0xff]
    %v39 = vld [vmem:[%s4 + $0x20] sm:$0xff]
    %v40 = vld [vmem:[%s4 + $0x28] sm:$0xff]
    %v41 = vld [vmem:[%s4 + $0x30] sm:$0xff]
    %v42 = vld [vmem:[%s4 + $0x38] sm:$0xff]
    %v43 = vld [vmem:[%s4 + $0x40] sm:$0xff]
    %v44 = vld [vmem:[%s4 + $0x48] sm:$0xff]
    %v45 = vld [vmem:[%s4 + $0x50] sm:$0xff]
    %v46 = vld [vmem:[%s4 + $0x58] sm:$0xff]
    %v47 = vld [vmem:[%s4 + $0x60] sm:$0xff]
    %v48 = vld [vmem:[%s4 + $0x68] sm:$0xff]
    %v49 = vld [vmem:[%s4 + $0x70] sm:$0xff]
    %v50 = vld [vmem:[%s4 + $0x78] sm:$0xff]
    %v51 = vld [vmem:[%s5] sm:$0xff]
    %v52 = vld [vmem:[%s5 + $0x8] sm:$0xff]
    %v53 = vld [vmem:[%s6] sm:$0xff]
    %v54 = vld [vmem:[%s6 + $0x8] sm:$0xff]
    %v55 = vld [vmem:[%s6 + $0x10] sm:$0xff]
    %v56 = vld [vmem:[%s6 + $0x18] sm:$0xff]
    %v57 = vld [vmem:[%s6 + $0x20] sm:$0xff]
    %v58 = vld [vmem:[%s6 + $0x28] sm:$0xff]
    %v59 = vld [vmem:[%s6 + $0x30] sm:$0xff]
    %v60 = vld [vmem:[%s6 + $0x38] sm:$0xff]
    %v61 = vld [vmem:[%s6 + $0x40] sm:$0xff]
    %v62 = vld [vmem:[%s6 + $0x48] sm:$0xff]
    %v63 = vld [vmem:[%s6 + $0x50] sm:$0xff]
    %v64 = vld [vmem:[%s6 + $0x58] sm:$0xff]
    %v65 = vld [vmem:[%s6 + $0x60] sm:$0xff]
    %v66 = vld [vmem:[%s6 + $0x68] sm:$0xff]
    %v67 = vld [vmem:[%s6 + $0x70] sm:$0xff]
    %v68 = vld [vmem:[%s6 + $0x78] sm:$0xff]
    %v69 = vld [vmem:[%s7] sm:$0xff]
    %v70 = vld [vmem:[%s7 + $0x8] sm:$0xff]
    %v71 = vld [vmem:[%s7 + $0x10] sm:$0xff]
    %v72 = vld [vmem:[%s7 + $0x18] sm:$0xff]
    %v73 = vld [vmem:[%s7 + $0x20] sm:$0xff]
    %v74 = vld [vmem:[%s7 + $0x28] sm:$0xff]
    %v75 = vld [vmem:[%s7 + $0x30] sm:$0xff]
    %v76 = vld [vmem:[%s7 + $0x38] sm:$0xff]
    %v77 = vld [vmem:[%s7 + $0x40] sm:$0xff]
    %v78 = vld [vmem:[%s7 + $0x48] sm:$0xff]
    %v79 = vld [vmem:[%s7 + $0x50] sm:$0xff]
    %v80 = vld [vmem:[%s7 + $0x58] sm:$0xff]
    %v81 = vld [vmem:[%s7 + $0x60] sm:$0xff]
    %v82 = vld [vmem:[%s7 + $0x68] sm:$0xff]
    %v83 = vld [vmem:[%s7 + $0x70] sm:$0xff]
    %v84 = vld [vmem:[%s7 + $0x78] sm:$0xff]
    %v85 = vld [vmem:[%s2] sm:$0xff]
    %v86 = vld [vmem:[%s2 + $0x8] sm:$0xff]
    %v87 = vld [vmem:[%s2 + $0x10] sm:$0xff]
    %v88 = vld [vmem:[%s2 + $0x18] sm:$0xff]
    %v89 = vld [vmem:[%s2 + $0x20] sm:$0xff]
    %v90 = vld [vmem:[%s2 + $0x28] sm:$0xff]
    %v91 = vld [vmem:[%s2 + $0x30] sm:$0xff]
    %v92 = vld [vmem:[%s2 + $0x38] sm:$0xff]
    %v93 = vld [vmem:[%s2 + $0x40] sm:$0xff]
    %v94 = vld [vmem:[%s2 + $0x48] sm:$0xff]
    %v95 = vld [vmem:[%s2 + $0x50] sm:$0xff]
    %v96 = vld [vmem:[%s2 + $0x58] sm:$0xff]
    %v97 = vld [vmem:[%s2 + $0x60] sm:$0xff]
    %v98 = vld [vmem:[%s2 + $0x68] sm:$0xff]
    %v99 = vld [vmem:[%s2 + $0x70] sm:$0xff]
    %v100 = vld [vmem:[%s2 + $0x78] sm:$0xff]
    %v101 = vld [vmem:[%s2 + $0x80] sm:$0xff]
    %v102 = vld [vmem:[%s2 + $0x88] sm:$0xff]
    %v103 = vld [vmem:[%s2 + $0x90] sm:$0xff]
    %v104 = vld [vmem:[%s2 + $0x98] sm:$0xff]
    %v105 = vld [vmem:[%s2 + $0xa0] sm:$0xff]
    %v106 = vld [vmem:[%s2 + $0xa8] sm:$0xff]
    %v107 = vld [vmem:[%s2 + $0xb0] sm:$0xff]
    %v108 = vld [vmem:[%s2 + $0xb8] sm:$0xff]
    %v109 = vld [vmem:[%s2 + $0xc0] sm:$0xff]
    %v110 = vld [vmem:[%s2 + $0xc8] sm:$0xff]
    %v111 = vld [vmem:[%s2 + $0xd0] sm:$0xff]
    %v112 = vld [vmem:[%s2 + $0xd8] sm:$0xff]
    %v113 = vld [vmem:[%s2 + $0xe0] sm:$0xff]
    %v114 = vld [vmem:[%s2 + $0xe8] sm:$0xff]
    %v115 = vld [vmem:[%s2 + $0xf0] sm:$0xff]
    %v116 = vld [vmem:[%s2 + $0xf8] sm:$0xff]
    %v117 = vld [vmem:[%s3] sm:$0xff]
    %v118 = vld [vmem:[%s3 + $0x8] sm:$0xff]
    %v119 = vlaneseq
    %v120 = vshrl.u32 %v119, 7
    %v121 = vsub.s32 0, %v120
    %v122 = vrot.slane %v118, %v121
    %vm123 = vcmask 523264
    %v125 = vsel %vm123, %v32, 0
    %v128 = vsel %vm123, %v33, 0
    %130 = vmatprep.subr.mxu0 0.0
    %131 = vmatpush1.msra.mxu0 %v85
    %132 = vmatprep.subr.mxu0 0.0
    %133 = vmatpush1.msra.mxu0 %v86
    %134 = vmatprep.subr.mxu0 0.0
    %135 = vmatpush1.msra.mxu0 %v87
    %136 = vmatprep.subr.mxu0 0.0
    %137 = vmatpush1.msra.mxu0 %v88
    %138 = vmatprep.subr.mxu0 0.0
    %139 = vmatpush1.msra.mxu0 %v89
    %140 = vmatprep.subr.mxu0 0.0
    %141 = vmatpush1.msra.mxu0 %v90
    %142 = vmatprep.subr.mxu0 0.0
    %143 = vmatpush1.msra.mxu0 %v91
    %144 = vmatprep.subr.mxu0 0.0
    %145 = vmatpush1.msra.mxu0 %v92
    %146 = vmatprep.subr.mxu0 0.0
    %147 = vmatpush1.msra.mxu0 0.0
    %148 = vmatprep.subr.mxu0 0.0
    %149 = vmatpush1.msra.mxu0 0.0
    %150 = vmatprep.subr.mxu0 0.0
    %151 = vmatpush1.msra.mxu0 0.0
    %152 = vmatprep.subr.mxu0 0.0
    %153 = vmatpush1.msra.mxu0 0.0
    %154 = vmatprep.subr.mxu0 0.0
    %155 = vmatpush1.msra.mxu0 0.0
    %156 = vmatprep.subr.mxu0 0.0
    %157 = vmatpush1.msra.mxu0 0.0
    %158 = vmatprep.subr.mxu0 0.0
    %159 = vmatpush1.msra.mxu0 0.0
    %160 = vmatprep.subr.mxu0 0.0
    %161 = vmatpush1.msra.mxu0 0.0
    %162 = vmatprep.subr.mxu0 0.0
    %163 = vmatpush1.msra.mxu0 0.0
    %164 = vmatprep.subr.mxu0 0.0
    %165 = vmatpush1.msra.mxu0 0.0
    %166 = vmatprep.subr.mxu0 0.0
    %167 = vmatpush1.msra.mxu0 0.0
    %168 = vmatprep.subr.mxu0 0.0
    %169 = vmatpush1.msra.mxu0 0.0
    %170 = vmatprep.subr.mxu0 0.0
    %171 = vmatpush1.msra.mxu0 0.0
    %172 = vmatprep.subr.mxu0 0.0
    %173 = vmatpush1.msra.mxu0 0.0
    %174 = vmatprep.subr.mxu0 0.0
    %175 = vmatpush1.msra.mxu0 0.0
    %176 = vmatprep.subr.mxu0 0.0
    %177 = vmatpush1.msra.mxu0 0.0
    %178 = vmatprep.subr.mxu0 0.0
    %179 = vmatpush1.msra.mxu0 0.0
    %180 = vmatprep.subr.mxu0 0.0
    %181 = vmatpush1.msra.mxu0 0.0
    %182 = vmatprep.subr.mxu0 0.0
    %183 = vmatpush1.msra.mxu0 0.0
    %184 = vmatprep.subr.mxu0 0.0
    %185 = vmatpush1.msra.mxu0 0.0
    %186 = vmatprep.subr.mxu0 0.0
    %187 = vmatpush1.msra.mxu0 0.0
    %188 = vmatprep.subr.mxu0 0.0
    %189 = vmatpush1.msra.mxu0 0.0
    %190 = vmatprep.subr.mxu0 0.0
    %191 = vmatpush1.msra.mxu0 0.0
    %192 = vmatprep.subr.mxu0 0.0
    %193 = vmatpush1.msra.mxu0 0.0
    %194 = vmatprep.mubr.f32.mxu0 0.0
    %195 = vmatmul.mubr.f32.gmra.mrb[0].mxu0 %v125
    %v196 = vpop.f32.mrb[0].mxu0
    %v197 = vadd.f32 %v122, %v196
    %v198 = vpop.f32.mrb[0].mxu0
    %199 = vmatprep.mubr.f32.mxu0 0.0
    %200 = vmatmul.mubr.f32.gmra.mrb[0].mxu0 %v128
    %v201 = vpop.f32.mrb[0].mxu0
    %v202 = vadd.f32 %v122, %v201
    %v203 = vpop.f32.mrb[0].mxu0
    %204 = vdwg.mxu0
    %v205 = vlaneseq
    %v206 = vshrl.u32 %v205, 7
    %v207 = vsub.s32 1, %v206
    %v208 = vrot.slane %v118, %v207
    %209 = vmatprep.subr.mxu0 0.0
    %210 = vmatpush1.msra.mxu0 %v93
    %211 = vmatprep.subr.mxu0 0.0
    %212 = vmatpush1.msra.mxu0 %v94
    %213 = vmatprep.subr.mxu0 0.0
    %214 = vmatpush1.msra.mxu0 %v95
    %215 = vmatprep.subr.mxu0 0.0
    %216 = vmatpush1.msra.mxu0 %v96
    %217 = vmatprep.subr.mxu0 0.0
    %218 = vmatpush1.msra.mxu0 %v97
    %219 = vmatprep.subr.mxu0 0.0
    %220 = vmatpush1.msra.mxu0 %v98
    %221 = vmatprep.subr.mxu0 0.0
    %222 = vmatpush1.msra.mxu0 %v99
    %223 = vmatprep.subr.mxu0 0.0
    %224 = vmatpush1.msra.mxu0 %v100
    %225 = vmatprep.subr.mxu0 0.0
    %226 = vmatpush1.msra.mxu0 0.0
    %227 = vmatprep.subr.mxu0 0.0
    %228 = vmatpush1.msra.mxu0 0.0
    %229 = vmatprep.subr.mxu0 0.0
    %230 = vmatpush1.msra.mxu0 0.0
    %231 = vmatprep.subr.mxu0 0.0
    %232 = vmatpush1.msra.mxu0 0.0
    %233 = vmatprep.subr.mxu0 0.0
    %234 = vmatpush1.msra.mxu0 0.0
    %235 = vmatprep.subr.mxu0 0.0
    %236 = vmatpush1.msra.mxu0 0.0
    %237 = vmatprep.subr.mxu0 0.0
    %238 = vmatpush1.msra.mxu0 0.0
    %239 = vmatprep.subr.mxu0 0.0
    %240 = vmatpush1.msra.mxu0 0.0
    %241 = vmatprep.subr.mxu0 0.0
    %242 = vmatpush1.msra.mxu0 0.0
    %243 = vmatprep.subr.mxu0 0.0
    %244 = vmatpush1.msra.mxu0 0.0
    %245 = vmatprep.subr.mxu0 0.0
    %246 = vmatpush1.msra.mxu0 0.0
    %247 = vmatprep.subr.mxu0 0.0
    %248 = vmatpush1.msra.mxu0 0.0
    %249 = vmatprep.subr.mxu0 0.0
    %250 = vmatpush1.msra.mxu0 0.0
    %251 = vmatprep.subr.mxu0 0.0
    %252 = vmatpush1.msra.mxu0 0.0
    %253 = vmatprep.subr.mxu0 0.0
    %254 = vmatpush1.msra.mxu0 0.0
    %255 = vmatprep.subr.mxu0 0.0
    %256 = vmatpush1.msra.mxu0 0.0
    %257 = vmatprep.subr.mxu0 0.0
    %258 = vmatpush1.msra.mxu0 0.0
    %259 = vmatprep.subr.mxu0 0.0
    %260 = vmatpush1.msra.mxu0 0.0
    %261 = vmatprep.subr.mxu0 0.0
    %262 = vmatpush1.msra.mxu0 0.0
    %263 = vmatprep.subr.mxu0 0.0
    %264 = vmatpush1.msra.mxu0 0.0
    %265 = vmatprep.subr.mxu0 0.0
    %266 = vmatpush1.msra.mxu0 0.0
    %267 = vmatprep.subr.mxu0 0.0
    %268 = vmatpush1.msra.mxu0 0.0
    %269 = vmatprep.subr.mxu0 0.0
    %270 = vmatpush1.msra.mxu0 0.0
    %271 = vmatprep.subr.mxu0 0.0
    %272 = vmatpush1.msra.mxu0 0.0
    %273 = vmatprep.mubr.f32.mxu0 0.0
    %274 = vmatmul.mubr.f32.gmra.mrb[0].mxu0 %v125
    %v275 = vpop.f32.mrb[0].mxu0
    %v276 = vadd.f32 %v208, %v275
    %v277 = vpop.f32.mrb[0].mxu0
    %278 = vmatprep.mubr.f32.mxu0 0.0
    %279 = vmatmul.mubr.f32.gmra.mrb[0].mxu0 %v128
    %v280 = vpop.f32.mrb[0].mxu0
    %v281 = vadd.f32 %v208, %v280
    %v282 = vpop.f32.mrb[0].mxu0
    %283 = vdwg.mxu0
    %v284 = vlaneseq
    %v285 = vshrl.u32 %v284, 7
    %v286 = vsub.s32 2, %v285
    %v287 = vrot.slane %v118, %v286
    %288 = vmatprep.subr.mxu0 0.0
    %289 = vmatpush1.msra.mxu0 %v101
    %290 = vmatprep.subr.mxu0 0.0
    %291 = vmatpush1.msra.mxu0 %v102
    %292 = vmatprep.subr.mxu0 0.0
    %293 = vmatpush1.msra.mxu0 %v103
    %294 = vmatprep.subr.mxu0 0.0
    %295 = vmatpush1.msra.mxu0 %v104
    %296 = vmatprep.subr.mxu0 0.0
    %297 = vmatpush1.msra.mxu0 %v105
    %298 = vmatprep.subr.mxu0 0.0
    %299 = vmatpush1.msra.mxu0 %v106
    %300 = vmatprep.subr.mxu0 0.0
    %301 = vmatpush1.msra.mxu0 %v107
    %302 = vmatprep.subr.mxu0 0.0
    %303 = vmatpush1.msra.mxu0 %v108
    %304 = vmatprep.subr.mxu0 0.0
    %305 = vmatpush1.msra.mxu0 0.0
    %306 = vmatprep.subr.mxu0 0.0
    %307 = vmatpush1.msra.mxu0 0.0
    %308 = vmatprep.subr.mxu0 0.0
    %309 = vmatpush1.msra.mxu0 0.0
    %310 = vmatprep.subr.mxu0 0.0
    %311 = vmatpush1.msra.mxu0 0.0
    %312 = vmatprep.subr.mxu0 0.0
    %313 = vmatpush1.msra.mxu0 0.0
    %314 = vmatprep.subr.mxu0 0.0
    %315 = vmatpush1.msra.mxu0 0.0
    %316 = vmatprep.subr.mxu0 0.0
    %317 = vmatpush1.msra.mxu0 0.0
    %318 = vmatprep.subr.mxu0 0.0
    %319 = vmatpush1.msra.mxu0 0.0
    %320 = vmatprep.subr.mxu0 0.0
    %321 = vmatpush1.msra.mxu0 0.0
    %322 = vmatprep.subr.mxu0 0.0
    %323 = vmatpush1.msra.mxu0 0.0
    %324 = vmatprep.subr.mxu0 0.0
    %325 = vmatpush1.msra.mxu0 0.0
    %326 = vmatprep.subr.mxu0 0.0
    %327 = vmatpush1.msra.mxu0 0.0
    %328 = vmatprep.subr.mxu0 0.0
    %329 = vmatpush1.msra.mxu0 0.0
    %330 = vmatprep.subr.mxu0 0.0
    %331 = vmatpush1.msra.mxu0 0.0
    %332 = vmatprep.subr.mxu0 0.0
    %333 = vmatpush1.msra.mxu0 0.0
    %334 = vmatprep.subr.mxu0 0.0
    %335 = vmatpush1.msra.mxu0 0.0
    %336 = vmatprep.subr.mxu0 0.0
    %337 = vmatpush1.msra.mxu0 0.0
    %338 = vmatprep.subr.mxu0 0.0
    %339 = vmatpush1.msra.mxu0 0.0
    %340 = vmatprep.subr.mxu0 0.0
    %341 = vmatpush1.msra.mxu0 0.0
    %342 = vmatprep.subr.mxu0 0.0
    %343 = vmatpush1.msra.mxu0 0.0
    %344 = vmatprep.subr.mxu0 0.0
    %345 = vmatpush1.msra.mxu0 0.0
    %346 = vmatprep.subr.mxu0 0.0
    %347 = vmatpush1.msra.mxu0 0.0
    %348 = vmatprep.subr.mxu0 0.0
    %349 = vmatpush1.msra.mxu0 0.0
    %350 = vmatprep.subr.mxu0 0.0
    %351 = vmatpush1.msra.mxu0 0.0
    %352 = vmatprep.mubr.f32.mxu0 0.0
    %353 = vmatmul.mubr.f32.gmra.mrb[0].mxu0 %v125
    %v354 = vpop.f32.mrb[0].mxu0
    %v355 = vadd.f32 %v287, %v354
    %v356 = vpop.f32.mrb[0].mxu0
    %357 = vmatprep.mubr.f32.mxu0 0.0
    %358 = vmatmul.mubr.f32.gmra.mrb[0].mxu0 %v128
    %v359 = vpop.f32.mrb[0].mxu0
    %v360 = vadd.f32 %v287, %v359
    %v361 = vpop.f32.mrb[0].mxu0
    %362 = vdwg.mxu0
    %vm363 = vcmask 130048
    %v365 = vsel %vm363, %v35, 0
    %v368 = vsel %vm363, %v36, 0
    %v371 = vsel %vm363, %v37, 0
    %v374 = vsel %vm363, %v38, 0
    %v377 = vsel %vm363, %v39, 0
    %v380 = vsel %vm363, %v40, 0
    %v383 = vsel %vm363, %v41, 0
    %v386 = vsel %vm363, %v42, 0
    %v389 = vsel %vm363, %v43, 0
    %v392 = vsel %vm363, %v44, 0
    %v395 = vsel %vm363, %v45, 0
    %v398 = vsel %vm363, %v46, 0
    %v401 = vsel %vm363, %v47, 0
    %v404 = vsel %vm363, %v48, 0
    %v407 = vsel %vm363, %v49, 0
    %v410 = vsel %vm363, %v50, 0
    %412 = vmatprep.subr.mxu0 0.0
    %413 = vmatpush1.msra.mxu0 %v197
    %414 = vmatprep.subr.mxu0 0.0
    %415 = vmatpush1.msra.mxu0 %v202
    %416 = vmatprep.subr.mxu0 0.0
    %417 = vmatpush1.msra.mxu0 0.0
    %418 = vmatprep.subr.mxu0 0.0
    %419 = vmatpush1.msra.mxu0 0.0
    %420 = vmatprep.subr.mxu0 0.0
    %421 = vmatpush1.msra.mxu0 0.0
    %422 = vmatprep.subr.mxu0 0.0
    %423 = vmatpush1.msra.mxu0 0.0
    %424 = vmatprep.subr.mxu0 0.0
    %425 = vmatpush1.msra.mxu0 0.0
    %426 = vmatprep.subr.mxu0 0.0
    %427 = vmatpush1.msra.mxu0 0.0
    %428 = vmatprep.subr.mxu0 0.0
    %429 = vmatpush1.msra.mxu0 0.0
    %430 = vmatprep.subr.mxu0 0.0
    %431 = vmatpush1.msra.mxu0 0.0
    %432 = vmatprep.subr.mxu0 0.0
    %433 = vmatpush1.msra.mxu0 0.0
    %434 = vmatprep.subr.mxu0 0.0
    %435 = vmatpush1.msra.mxu0 0.0
    %436 = vmatprep.subr.mxu0 0.0
    %437 = vmatpush1.msra.mxu0 0.0
    %438 = vmatprep.subr.mxu0 0.0
    %439 = vmatpush1.msra.mxu0 0.0
    %440 = vmatprep.subr.mxu0 0.0
    %441 = vmatpush1.msra.mxu0 0.0
    %442 = vmatprep.subr.mxu0 0.0
    %443 = vmatpush1.msra.mxu0 0.0
    %444 = vmatprep.subr.mxu0 0.0
    %445 = vmatpush1.msra.mxu0 0.0
    %446 = vmatprep.subr.mxu0 0.0
    %447 = vmatpush1.msra.mxu0 0.0
    %448 = vmatprep.subr.mxu0 0.0
    %449 = vmatpush1.msra.mxu0 0.0
    %450 = vmatprep.subr.mxu0 0.0
    %451 = vmatpush1.msra.mxu0 0.0
    %452 = vmatprep.subr.mxu0 0.0
    %453 = vmatpush1.msra.mxu0 0.0
    %454 = vmatprep.subr.mxu0 0.0
    %455 = vmatpush1.msra.mxu0 0.0
    %456 = vmatprep.subr.mxu0 0.0
    %457 = vmatpush1.msra.mxu0 0.0
    %458 = vmatprep.subr.mxu0 0.0
    %459 = vmatpush1.msra.mxu0 0.0
    %460 = vmatprep.subr.mxu0 0.0
    %461 = vmatpush1.msra.mxu0 0.0
    %462 = vmatprep.subr.mxu0 0.0
    %463 = vmatpush1.msra.mxu0 0.0
    %464 = vmatprep.subr.mxu0 0.0
    %465 = vmatpush1.msra.mxu0 0.0
    %466 = vmatprep.subr.mxu0 0.0
    %467 = vmatpush1.msra.mxu0 0.0
    %468 = vmatprep.subr.mxu0 0.0
    %469 = vmatpush1.msra.mxu0 0.0
    %470 = vmatprep.subr.mxu0 0.0
    %471 = vmatpush1.msra.mxu0 0.0
    %472 = vmatprep.subr.mxu0 0.0
    %473 = vmatpush1.msra.mxu0 0.0
    %474 = vmatprep.subr.mxu0 0.0
    %475 = vmatpush1.msra.mxu0 0.0
    %476 = vmatprep.mubr.f32.mxu0 0.0
    %477 = vmatmul.mubr.f32.gmra.mrb[0].mxu0 %v365
    %v478 = vpop.f32.mrb[0].mxu0
    %v479 = vadd.f32 0.0, %v478
    %v480 = vpop.f32.mrb[0].mxu0
    %481 = vmatprep.mubr.f32.mxu0 0.0
    %482 = vmatmul.mubr.f32.gmra.mrb[0].mxu0 %v368
    %v483 = vpop.f32.mrb[0].mxu0
    %v484 = vadd.f32 0.0, %v483
    %v485 = vpop.f32.mrb[0].mxu0
    %486 = vmatprep.mubr.f32.mxu0 0.0
    %487 = vmatmul.mubr.f32.gmra.mrb[0].mxu0 %v371
    %v488 = vpop.f32.mrb[0].mxu0
    %v489 = vadd.f32 0.0, %v488
    %v490 = vpop.f32.mrb[0].mxu0
    %491 = vmatprep.mubr.f32.mxu0 0.0
    %492 = vmatmul.mubr.f32.gmra.mrb[0].mxu0 %v374
    %v493 = vpop.f32.mrb[0].mxu0
    %v494 = vadd.f32 0.0, %v493
    %v495 = vpop.f32.mrb[0].mxu0
    %496 = vmatprep.mubr.f32.mxu0 0.0
    %497 = vmatmul.mubr.f32.gmra.mrb[0].mxu0 %v377
    %v498 = vpop.f32.mrb[0].mxu0
    %v499 = vadd.f32 0.0, %v498
    %v500 = vpop.f32.mrb[0].mxu0
    %501 = vmatprep.mubr.f32.mxu0 0.0
    %502 = vmatmul.mubr.f32.gmra.mrb[0].mxu0 %v380
    %v503 = vpop.f32.mrb[0].mxu0
    %v504 = vadd.f32 0.0, %v503
    %v505 = vpop.f32.mrb[0].mxu0
    %506 = vmatprep.mubr.f32.mxu0 0.0
    %507 = vmatmul.mubr.f32.gmra.mrb[0].mxu0 %v383
    %v508 = vpop.f32.mrb[0].mxu0
    %v509 = vadd.f32 0.0, %v508
    %v510 = vpop.f32.mrb[0].mxu0
    %511 = vmatprep.mubr.f32.mxu0 0.0
    %512 = vmatmul.mubr.f32.gmra.mrb[0].mxu0 %v386
    %v513 = vpop.f32.mrb[0].mxu0
    %v514 = vadd.f32 0.0, %v513
    %v515 = vpop.f32.mrb[0].mxu0
    %516 = vmatprep.mubr.f32.mxu0 0.0
    %517 = vmatmul.mubr.f32.gmra.mrb[0].mxu0 %v389
    %v518 = vpop.f32.mrb[0].mxu0
    %v519 = vadd.f32 0.0, %v518
    %v520 = vpop.f32.mrb[0].mxu0
    %521 = vmatprep.mubr.f32.mxu0 0.0
    %522 = vmatmul.mubr.f32.gmra.mrb[0].mxu0 %v392
    %v523 = vpop.f32.mrb[0].mxu0
    %v524 = vadd.f32 0.0, %v523
    %v525 = vpop.f32.mrb[0].mxu0
    %526 = vmatprep.mubr.f32.mxu0 0.0
    %527 = vmatmul.mubr.f32.gmra.mrb[0].mxu0 %v395
    %v528 = vpop.f32.mrb[0].mxu0
    %v529 = vadd.f32 0.0, %v528
    %v530 = vpop.f32.mrb[0].mxu0
    %531 = vmatprep.mubr.f32.mxu0 0.0
    %532 = vmatmul.mubr.f32.gmra.mrb[0].mxu0 %v398
    %v533 = vpop.f32.mrb[0].mxu0
    %v534 = vadd.f32 0.0, %v533
    %v535 = vpop.f32.mrb[0].mxu0
    %536 = vmatprep.mubr.f32.mxu0 0.0
    %537 = vmatmul.mubr.f32.gmra.mrb[0].mxu0 %v401
    %v538 = vpop.f32.mrb[0].mxu0
    %v539 = vadd.f32 0.0, %v538
    %v540 = vpop.f32.mrb[0].mxu0
    %541 = vmatprep.mubr.f32.mxu0 0.0
    %542 = vmatmul.mubr.f32.gmra.mrb[0].mxu0 %v404
    %v543 = vpop.f32.mrb[0].mxu0
    %v544 = vadd.f32 0.0, %v543
    %v545 = vpop.f32.mrb[0].mxu0
    %546 = vmatprep.mubr.f32.mxu0 0.0
    %547 = vmatmul.mubr.f32.gmra.mrb[0].mxu0 %v407
    %v548 = vpop.f32.mrb[0].mxu0
    %v549 = vadd.f32 0.0, %v548
    %v550 = vpop.f32.mrb[0].mxu0
    %551 = vmatprep.mubr.f32.mxu0 0.0
    %552 = vmatmul.mubr.f32.gmra.mrb[0].mxu0 %v410
    %v553 = vpop.f32.mrb[0].mxu0
    %v554 = vadd.f32 0.0, %v553
    %v555 = vpop.f32.mrb[0].mxu0
    %556 = vdwg.mxu0
    %557 = vmatprep.subr.mxu0 0.0
    %558 = vmatpush1.msra.mxu0 %v276
    %559 = vmatprep.subr.mxu0 0.0
    %560 = vmatpush1.msra.mxu0 %v281
    %561 = vmatprep.subr.mxu0 0.0
    %562 = vmatpush1.msra.mxu0 0.0
    %563 = vmatprep.subr.mxu0 0.0
    %564 = vmatpush1.msra.mxu0 0.0
    %565 = vmatprep.subr.mxu0 0.0
    %566 = vmatpush1.msra.mxu0 0.0
    %567 = vmatprep.subr.mxu0 0.0
    %568 = vmatpush1.msra.mxu0 0.0
    %569 = vmatprep.subr.mxu0 0.0
    %570 = vmatpush1.msra.mxu0 0.0
    %571 = vmatprep.subr.mxu0 0.0
    %572 = vmatpush1.msra.mxu0 0.0
    %573 = vmatprep.subr.mxu0 0.0
    %574 = vmatpush1.msra.mxu0 0.0
    %575 = vmatprep.subr.mxu0 0.0
    %576 = vmatpush1.msra.mxu0 0.0
    %577 = vmatprep.subr.mxu0 0.0
    %578 = vmatpush1.msra.mxu0 0.0
    %579 = vmatprep.subr.mxu0 0.0
    %580 = vmatpush1.msra.mxu0 0.0
    %581 = vmatprep.subr.mxu0 0.0
    %582 = vmatpush1.msra.mxu0 0.0
    %583 = vmatprep.subr.mxu0 0.0
    %584 = vmatpush1.msra.mxu0 0.0
    %585 = vmatprep.subr.mxu0 0.0
    %586 = vmatpush1.msra.mxu0 0.0
    %587 = vmatprep.subr.mxu0 0.0
    %588 = vmatpush1.msra.mxu0 0.0
    %589 = vmatprep.subr.mxu0 0.0
    %590 = vmatpush1.msra.mxu0 0.0
    %591 = vmatprep.subr.mxu0 0.0
    %592 = vmatpush1.msra.mxu0 0.0
    %593 = vmatprep.subr.mxu0 0.0
    %594 = vmatpush1.msra.mxu0 0.0
    %595 = vmatprep.subr.mxu0 0.0
    %596 = vmatpush1.msra.mxu0 0.0
    %597 = vmatprep.subr.mxu0 0.0
    %598 = vmatpush1.msra.mxu0 0.0
    %599 = vmatprep.subr.mxu0 0.0
    %600 = vmatpush1.msra.mxu0 0.0
    %601 = vmatprep.subr.mxu0 0.0
    %602 = vmatpush1.msra.mxu0 0.0
    %603 = vmatprep.subr.mxu0 0.0
    %604 = vmatpush1.msra.mxu0 0.0
    %605 = vmatprep.subr.mxu0 0.0
    %606 = vmatpush1.msra.mxu0 0.0
    %607 = vmatprep.subr.mxu0 0.0
    %608 = vmatpush1.msra.mxu0 0.0
    %609 = vmatprep.subr.mxu0 0.0
    %610 = vmatpush1.msra.mxu0 0.0
    %611 = vmatprep.subr.mxu0 0.0
    %612 = vmatpush1.msra.mxu0 0.0
    %613 = vmatprep.subr.mxu0 0.0
    %614 = vmatpush1.msra.mxu0 0.0
    %615 = vmatprep.subr.mxu0 0.0
    %616 = vmatpush1.msra.mxu0 0.0
    %617 = vmatprep.subr.mxu0 0.0
    %618 = vmatpush1.msra.mxu0 0.0
    %619 = vmatprep.subr.mxu0 0.0
    %620 = vmatpush1.msra.mxu0 0.0
    %621 = vmatprep.mubr.f32.mxu0 0.0
    %622 = vmatmul.mubr.f32.gmra.mrb[0].mxu0 %v365
    %v623 = vpop.f32.mrb[0].mxu0
    %v624 = vadd.f32 0.0, %v623
    %v625 = vpop.f32.mrb[0].mxu0
    %626 = vmatprep.mubr.f32.mxu0 0.0
    %627 = vmatmul.mubr.f32.gmra.mrb[0].mxu0 %v368
    %v628 = vpop.f32.mrb[0].mxu0
    %v629 = vadd.f32 0.0, %v628
    %v630 = vpop.f32.mrb[0].mxu0
    %631 = vmatprep.mubr.f32.mxu0 0.0
    %632 = vmatmul.mubr.f32.gmra.mrb[0].mxu0 %v371
    %v633 = vpop.f32.mrb[0].mxu0
    %v634 = vadd.f32 0.0, %v633
    %v635 = vpop.f32.mrb[0].mxu0
    %636 = vmatprep.mubr.f32.mxu0 0.0
    %637 = vmatmul.mubr.f32.gmra.mrb[0].mxu0 %v374
    %v638 = vpop.f32.mrb[0].mxu0
    %v639 = vadd.f32 0.0, %v638
    %v640 = vpop.f32.mrb[0].mxu0
    %641 = vmatprep.mubr.f32.mxu0 0.0
    %642 = vmatmul.mubr.f32.gmra.mrb[0].mxu0 %v377
    %v643 = vpop.f32.mrb[0].mxu0
    %v644 = vadd.f32 0.0, %v643
    %v645 = vpop.f32.mrb[0].mxu0
    %646 = vmatprep.mubr.f32.mxu0 0.0
    %647 = vmatmul.mubr.f32.gmra.mrb[0].mxu0 %v380
    %v648 = vpop.f32.mrb[0].mxu0
    %v649 = vadd.f32 0.0, %v648
    %v650 = vpop.f32.mrb[0].mxu0
    %651 = vmatprep.mubr.f32.mxu0 0.0
    %652 = vmatmul.mubr.f32.gmra.mrb[0].mxu0 %v383
    %v653 = vpop.f32.mrb[0].mxu0
    %v654 = vadd.f32 0.0, %v653
    %v655 = vpop.f32.mrb[0].mxu0
    %656 = vmatprep.mubr.f32.mxu0 0.0
    %657 = vmatmul.mubr.f32.gmra.mrb[0].mxu0 %v386
    %v658 = vpop.f32.mrb[0].mxu0
    %v659 = vadd.f32 0.0, %v658
    %v660 = vpop.f32.mrb[0].mxu0
    %661 = vmatprep.mubr.f32.mxu0 0.0
    %662 = vmatmul.mubr.f32.gmra.mrb[0].mxu0 %v389
    %v663 = vpop.f32.mrb[0].mxu0
    %v664 = vadd.f32 0.0, %v663
    %v665 = vpop.f32.mrb[0].mxu0
    %666 = vmatprep.mubr.f32.mxu0 0.0
    %667 = vmatmul.mubr.f32.gmra.mrb[0].mxu0 %v392
    %v668 = vpop.f32.mrb[0].mxu0
    %v669 = vadd.f32 0.0, %v668
    %v670 = vpop.f32.mrb[0].mxu0
    %671 = vmatprep.mubr.f32.mxu0 0.0
    %672 = vmatmul.mubr.f32.gmra.mrb[0].mxu0 %v395
    %v673 = vpop.f32.mrb[0].mxu0
    %v674 = vadd.f32 0.0, %v673
    %v675 = vpop.f32.mrb[0].mxu0
    %676 = vmatprep.mubr.f32.mxu0 0.0
    %677 = vmatmul.mubr.f32.gmra.mrb[0].mxu0 %v398
    %v678 = vpop.f32.mrb[0].mxu0
    %v679 = vadd.f32 0.0, %v678
    %v680 = vpop.f32.mrb[0].mxu0
    %681 = vmatprep.mubr.f32.mxu0 0.0
    %682 = vmatmul.mubr.f32.gmra.mrb[0].mxu0 %v401
    %v683 = vpop.f32.mrb[0].mxu0
    %v684 = vadd.f32 0.0, %v683
    %v685 = vpop.f32.mrb[0].mxu0
    %686 = vmatprep.mubr.f32.mxu0 0.0
    %687 = vmatmul.mubr.f32.gmra.mrb[0].mxu0 %v404
    %v688 = vpop.f32.mrb[0].mxu0
    %v689 = vadd.f32 0.0, %v688
    %v690 = vpop.f32.mrb[0].mxu0
    %691 = vmatprep.mubr.f32.mxu0 0.0
    %692 = vmatmul.mubr.f32.gmra.mrb[0].mxu0 %v407
    %v693 = vpop.f32.mrb[0].mxu0
    %v694 = vadd.f32 0.0, %v693
    %v695 = vpop.f32.mrb[0].mxu0
    %696 = vmatprep.mubr.f32.mxu0 0.0
    %697 = vmatmul.mubr.f32.gmra.mrb[0].mxu0 %v410
    %v698 = vpop.f32.mrb[0].mxu0
    %v699 = vadd.f32 0.0, %v698
    %v700 = vpop.f32.mrb[0].mxu0
    %701 = vdwg.mxu0
    %702 = vmatprep.subr.mxu0 0.0
    %703 = vmatpush1.msra.mxu0 %v355
    %704 = vmatprep.subr.mxu0 0.0
    %705 = vmatpush1.msra.mxu0 %v360
    %706 = vmatprep.subr.mxu0 0.0
    %707 = vmatpush1.msra.mxu0 0.0
    %708 = vmatprep.subr.mxu0 0.0
    %709 = vmatpush1.msra.mxu0 0.0
    %710 = vmatprep.subr.mxu0 0.0
    %711 = vmatpush1.msra.mxu0 0.0
    %712 = vmatprep.subr.mxu0 0.0
    %713 = vmatpush1.msra.mxu0 0.0
    %714 = vmatprep.subr.mxu0 0.0
    %715 = vmatpush1.msra.mxu0 0.0
    %716 = vmatprep.subr.mxu0 0.0
    %717 = vmatpush1.msra.mxu0 0.0
    %718 = vmatprep.subr.mxu0 0.0
    %719 = vmatpush1.msra.mxu0 0.0
    %720 = vmatprep.subr.mxu0 0.0
    %721 = vmatpush1.msra.mxu0 0.0
    %722 = vmatprep.subr.mxu0 0.0
    %723 = vmatpush1.msra.mxu0 0.0
    %724 = vmatprep.subr.mxu0 0.0
    %725 = vmatpush1.msra.mxu0 0.0
    %726 = vmatprep.subr.mxu0 0.0
    %727 = vmatpush1.msra.mxu0 0.0
    %728 = vmatprep.subr.mxu0 0.0
    %729 = vmatpush1.msra.mxu0 0.0
    %730 = vmatprep.subr.mxu0 0.0
    %731 = vmatpush1.msra.mxu0 0.0
    %732 = vmatprep.subr.mxu0 0.0
    %733 = vmatpush1.msra.mxu0 0.0
    %734 = vmatprep.subr.mxu0 0.0
    %735 = vmatpush1.msra.mxu0 0.0
    %736 = vmatprep.subr.mxu0 0.0
    %737 = vmatpush1.msra.mxu0 0.0
    %738 = vmatprep.subr.mxu0 0.0
    %739 = vmatpush1.msra.mxu0 0.0
    %740 = vmatprep.subr.mxu0 0.0
    %741 = vmatpush1.msra.mxu0 0.0
    %742 = vmatprep.subr.mxu0 0.0
    %743 = vmatpush1.msra.mxu0 0.0
    %744 = vmatprep.subr.mxu0 0.0
    %745 = vmatpush1.msra.mxu0 0.0
    %746 = vmatprep.subr.mxu0 0.0
    %747 = vmatpush1.msra.mxu0 0.0
    %748 = vmatprep.subr.mxu0 0.0
    %749 = vmatpush1.msra.mxu0 0.0
    %750 = vmatprep.subr.mxu0 0.0
    %751 = vmatpush1.msra.mxu0 0.0
    %752 = vmatprep.subr.mxu0 0.0
    %753 = vmatpush1.msra.mxu0 0.0
    %754 = vmatprep.subr.mxu0 0.0
    %755 = vmatpush1.msra.mxu0 0.0
    %756 = vmatprep.subr.mxu0 0.0
    %757 = vmatpush1.msra.mxu0 0.0
    %758 = vmatprep.subr.mxu0 0.0
    %759 = vmatpush1.msra.mxu0 0.0
    %760 = vmatprep.subr.mxu0 0.0
    %761 = vmatpush1.msra.mxu0 0.0
    %762 = vmatprep.subr.mxu0 0.0
    %763 = vmatpush1.msra.mxu0 0.0
    %764 = vmatprep.subr.mxu0 0.0
    %765 = vmatpush1.msra.mxu0 0.0
    %766 = vmatprep.mubr.f32.mxu0 0.0
    %767 = vmatmul.mubr.f32.gmra.mrb[0].mxu0 %v365
    %v768 = vpop.f32.mrb[0].mxu0
    %v769 = vadd.f32 0.0, %v768
    %v770 = vpop.f32.mrb[0].mxu0
    %771 = vmatprep.mubr.f32.mxu0 0.0
    %772 = vmatmul.mubr.f32.gmra.mrb[0].mxu0 %v368
    %v773 = vpop.f32.mrb[0].mxu0
    %v774 = vadd.f32 0.0, %v773
    %v775 = vpop.f32.mrb[0].mxu0
    %776 = vmatprep.mubr.f32.mxu0 0.0
    %777 = vmatmul.mubr.f32.gmra.mrb[0].mxu0 %v371
    %v778 = vpop.f32.mrb[0].mxu0
    %v779 = vadd.f32 0.0, %v778
    %v780 = vpop.f32.mrb[0].mxu0
    %781 = vmatprep.mubr.f32.mxu0 0.0
    %782 = vmatmul.mubr.f32.gmra.mrb[0].mxu0 %v374
    %v783 = vpop.f32.mrb[0].mxu0
    %v784 = vadd.f32 0.0, %v783
    %v785 = vpop.f32.mrb[0].mxu0
    %786 = vmatprep.mubr.f32.mxu0 0.0
    %787 = vmatmul.mubr.f32.gmra.mrb[0].mxu0 %v377
    %v788 = vpop.f32.mrb[0].mxu0
    %v789 = vadd.f32 0.0, %v788
    %v790 = vpop.f32.mrb[0].mxu0
    %791 = vmatprep.mubr.f32.mxu0 0.0
    %792 = vmatmul.mubr.f32.gmra.mrb[0].mxu0 %v380
    %v793 = vpop.f32.mrb[0].mxu0
    %v794 = vadd.f32 0.0, %v793
    %v795 = vpop.f32.mrb[0].mxu0
    %796 = vmatprep.mubr.f32.mxu0 0.0
    %797 = vmatmul.mubr.f32.gmra.mrb[0].mxu0 %v383
    %v798 = vpop.f32.mrb[0].mxu0
    %v799 = vadd.f32 0.0, %v798
    %v800 = vpop.f32.mrb[0].mxu0
    %801 = vmatprep.mubr.f32.mxu0 0.0
    %802 = vmatmul.mubr.f32.gmra.mrb[0].mxu0 %v386
    %v803 = vpop.f32.mrb[0].mxu0
    %v804 = vadd.f32 0.0, %v803
    %v805 = vpop.f32.mrb[0].mxu0
    %806 = vmatprep.mubr.f32.mxu0 0.0
    %807 = vmatmul.mubr.f32.gmra.mrb[0].mxu0 %v389
    %v808 = vpop.f32.mrb[0].mxu0
    %v809 = vadd.f32 0.0, %v808
    %v810 = vpop.f32.mrb[0].mxu0
    %811 = vmatprep.mubr.f32.mxu0 0.0
    %812 = vmatmul.mubr.f32.gmra.mrb[0].mxu0 %v392
    %v813 = vpop.f32.mrb[0].mxu0
    %v814 = vadd.f32 0.0, %v813
    %v815 = vpop.f32.mrb[0].mxu0
    %816 = vmatprep.mubr.f32.mxu0 0.0
    %817 = vmatmul.mubr.f32.gmra.mrb[0].mxu0 %v395
    %v818 = vpop.f32.mrb[0].mxu0
    %v819 = vadd.f32 0.0, %v818
    %v820 = vpop.f32.mrb[0].mxu0
    %821 = vmatprep.mubr.f32.mxu0 0.0
    %822 = vmatmul.mubr.f32.gmra.mrb[0].mxu0 %v398
    %v823 = vpop.f32.mrb[0].mxu0
    %v824 = vadd.f32 0.0, %v823
    %v825 = vpop.f32.mrb[0].mxu0
    %826 = vmatprep.mubr.f32.mxu0 0.0
    %827 = vmatmul.mubr.f32.gmra.mrb[0].mxu0 %v401
    %v828 = vpop.f32.mrb[0].mxu0
    %v829 = vadd.f32 0.0, %v828
    %v830 = vpop.f32.mrb[0].mxu0
    %831 = vmatprep.mubr.f32.mxu0 0.0
    %832 = vmatmul.mubr.f32.gmra.mrb[0].mxu0 %v404
    %v833 = vpop.f32.mrb[0].mxu0
    %v834 = vadd.f32 0.0, %v833
    %v835 = vpop.f32.mrb[0].mxu0
    %836 = vmatprep.mubr.f32.mxu0 0.0
    %837 = vmatmul.mubr.f32.gmra.mrb[0].mxu0 %v407
    %v838 = vpop.f32.mrb[0].mxu0
    %v839 = vadd.f32 0.0, %v838
    %v840 = vpop.f32.mrb[0].mxu0
    %841 = vmatprep.mubr.f32.mxu0 0.0
    %842 = vmatmul.mubr.f32.gmra.mrb[0].mxu0 %v410
    %v843 = vpop.f32.mrb[0].mxu0
    %v844 = vadd.f32 0.0, %v843
    %v845 = vpop.f32.mrb[0].mxu0
    %846 = vdwg.mxu0
    %v847 = vmul.f32 %v479, %v53
    %v848 = vmul.f32 %v484, %v54
    %v849 = vmul.f32 %v489, %v55
    %v850 = vmul.f32 %v494, %v56
    %v851 = vmul.f32 %v499, %v57
    %v852 = vmul.f32 %v504, %v58
    %v853 = vmul.f32 %v509, %v59
    %v854 = vmul.f32 %v514, %v60
    %v855 = vmul.f32 %v519, %v61
    %v856 = vmul.f32 %v524, %v62
    %v857 = vmul.f32 %v529, %v63
    %v858 = vmul.f32 %v534, %v64
    %v859 = vmul.f32 %v539, %v65
    %v860 = vmul.f32 %v544, %v66
    %v861 = vmul.f32 %v549, %v67
    %v862 = vmul.f32 %v554, %v68
    %v863 = vmul.f32 %v769, %v53
    %v864 = vmul.f32 %v774, %v54
    %v865 = vmul.f32 %v779, %v55
    %v866 = vmul.f32 %v784, %v56
    %v867 = vmul.f32 %v789, %v57
    %v868 = vmul.f32 %v794, %v58
    %v869 = vmul.f32 %v799, %v59
    %v870 = vmul.f32 %v804, %v60
    %v871 = vmul.f32 %v809, %v61
    %v872 = vmul.f32 %v814, %v62
    %v873 = vmul.f32 %v819, %v63
    %v874 = vmul.f32 %v824, %v64
    %v875 = vmul.f32 %v829, %v65
    %v876 = vmul.f32 %v834, %v66
    %v877 = vmul.f32 %v839, %v67
    %v878 = vmul.f32 %v844, %v68
    %v879 = vlaneseq
    %v880 = vand.u32 %v879, 127
    %vm881 = vcmp.eq.s32.totalorder %v880, 3
    %v882 = vsel %vm881, 1.0, 0.0
    %v884 = vsel %vm123, %v847, 0
    %v887 = vsel %vm123, %v848, 0
    %v890 = vsel %vm123, %v849, 0
    %v893 = vsel %vm123, %v850, 0
    %v896 = vsel %vm123, %v851, 0
    %v899 = vsel %vm123, %v852, 0
    %v902 = vsel %vm123, %v853, 0
    %v905 = vsel %vm123, %v854, 0
    %v908 = vsel %vm123, %v855, 0
    %v911 = vsel %vm123, %v856, 0
    %v914 = vsel %vm123, %v857, 0
    %v917 = vsel %vm123, %v858, 0
    %v920 = vsel %vm123, %v859, 0
    %v923 = vsel %vm123, %v860, 0
    %v926 = vsel %vm123, %v861, 0
    %v929 = vsel %vm123, %v862, 0
    %v932 = vsel %vm123, %v117, 0
    %934 = vmatprep.subr.mxu0 0.0
    %935 = vmatpush1.xpose.msra.mxu0 %v932
    %936 = vmatprep.subr.mxu0 0.0
    %937 = vmatpush1.xpose.msra.mxu0 0.0
    %938 = vmatprep.subr.mxu0 0.0
    %939 = vmatpush1.xpose.msra.mxu0 0.0
    %940 = vmatprep.subr.mxu0 0.0
    %941 = vmatpush1.xpose.msra.mxu0 0.0
    %942 = vmatprep.subr.mxu0 0.0
    %943 = vmatpush1.xpose.msra.mxu0 0.0
    %944 = vmatprep.subr.mxu0 0.0
    %945 = vmatpush1.xpose.msra.mxu0 0.0
    %946 = vmatprep.subr.mxu0 0.0
    %947 = vmatpush1.xpose.msra.mxu0 0.0
    %948 = vmatprep.subr.mxu0 0.0
    %949 = vmatpush1.xpose.msra.mxu0 0.0
    %950 = vmatprep.subr.mxu0 0.0
    %951 = vmatpush1.xpose.msra.mxu0 0.0
    %952 = vmatprep.subr.mxu0 0.0
    %953 = vmatpush1.xpose.msra.mxu0 0.0
    %954 = vmatprep.subr.mxu0 0.0
    %955 = vmatpush1.xpose.msra.mxu0 0.0
    %956 = vmatprep.subr.mxu0 0.0
    %957 = vmatpush1.xpose.msra.mxu0 0.0
    %958 = vmatprep.subr.mxu0 0.0
    %959 = vmatpush1.xpose.msra.mxu0 0.0
    %960 = vmatprep.subr.mxu0 0.0
    %961 = vmatpush1.xpose.msra.mxu0 0.0
    %962 = vmatprep.subr.mxu0 0.0
    %963 = vmatpush1.xpose.msra.mxu0 0.0
    %964 = vmatprep.subr.mxu0 0.0
    %965 = vmatpush1.xpose.msra.mxu0 0.0
    %966 = vmatprep.subr.mxu0 0.0
    %967 = vmatpush1.xpose.msra.mxu0 0.0
    %968 = vmatprep.subr.mxu0 0.0
    %969 = vmatpush1.xpose.msra.mxu0 0.0
    %970 = vmatprep.subr.mxu0 0.0
    %971 = vmatpush1.xpose.msra.mxu0 0.0
    %972 = vmatprep.subr.mxu0 0.0
    %973 = vmatpush1.xpose.msra.mxu0 0.0
    %974 = vmatprep.subr.mxu0 0.0
    %975 = vmatpush1.xpose.msra.mxu0 0.0
    %976 = vmatprep.subr.mxu0 0.0
    %977 = vmatpush1.xpose.msra.mxu0 0.0
    %978 = vmatprep.subr.mxu0 0.0
    %979 = vmatpush1.xpose.msra.mxu0 0.0
    %980 = vmatprep.subr.mxu0 0.0
    %981 = vmatpush1.xpose.msra.mxu0 0.0
    %982 = vmatprep.subr.mxu0 0.0
    %983 = vmatpush1.xpose.msra.mxu0 0.0
    %984 = vmatprep.subr.mxu0 0.0
    %985 = vmatpush1.xpose.msra.mxu0 0.0
    %986 = vmatprep.subr.mxu0 0.0
    %987 = vmatpush1.xpose.msra.mxu0 0.0
    %988 = vmatprep.subr.mxu0 0.0
    %989 = vmatpush1.xpose.msra.mxu0 0.0
    %990 = vmatprep.subr.mxu0 0.0
    %991 = vmatpush1.xpose.msra.mxu0 0.0
    %992 = vmatprep.subr.mxu0 0.0
    %993 = vmatpush1.xpose.msra.mxu0 0.0
    %994 = vmatprep.subr.mxu0 0.0
    %995 = vmatpush1.xpose.msra.mxu0 0.0
    %996 = vmatprep.subr.mxu0 0.0
    %997 = vmatpush1.xpose.msra.mxu0 0.0
    %998 = vmatprep.mubr.f32.mxu0 0.0
    %999 = vmatmul.mubr.f32.gmra.mrb[0].mxu0 %v884
    %v1000 = vpop.f32.mrb[0].mxu0
    %v1001 = vadd.f32 %v882, %v1000
    %v1002 = vpop.f32.mrb[0].mxu0
    %1003 = vmatprep.mubr.f32.mxu0 0.0
    %1004 = vmatmul.mubr.f32.gmra.mrb[0].mxu0 %v887
    %v1005 = vpop.f32.mrb[0].mxu0
    %v1006 = vadd.f32 %v882, %v1005
    %v1007 = vpop.f32.mrb[0].mxu0
    %1008 = vmatprep.mubr.f32.mxu0 0.0
    %1009 = vmatmul.mubr.f32.gmra.mrb[0].mxu0 %v890
    %v1010 = vpop.f32.mrb[0].mxu0
    %v1011 = vadd.f32 %v882, %v1010
    %v1012 = vpop.f32.mrb[0].mxu0
    %1013 = vmatprep.mubr.f32.mxu0 0.0
    %1014 = vmatmul.mubr.f32.gmra.mrb[0].mxu0 %v893
    %v1015 = vpop.f32.mrb[0].mxu0
    %v1016 = vadd.f32 %v882, %v1015
    %v1017 = vpop.f32.mrb[0].mxu0
    %1018 = vmatprep.mubr.f32.mxu0 0.0
    %1019 = vmatmul.mubr.f32.gmra.mrb[0].mxu0 %v896
    %v1020 = vpop.f32.mrb[0].mxu0
    %v1021 = vadd.f32 %v882, %v1020
    %v1022 = vpop.f32.mrb[0].mxu0
    %1023 = vmatprep.mubr.f32.mxu0 0.0
    %1024 = vmatmul.mubr.f32.gmra.mrb[0].mxu0 %v899
    %v1025 = vpop.f32.mrb[0].mxu0
    %v1026 = vadd.f32 %v882, %v1025
    %v1027 = vpop.f32.mrb[0].mxu0
    %1028 = vmatprep.mubr.f32.mxu0 0.0
    %1029 = vmatmul.mubr.f32.gmra.mrb[0].mxu0 %v902
    %v1030 = vpop.f32.mrb[0].mxu0
    %v1031 = vadd.f32 %v882, %v1030
    %v1032 = vpop.f32.mrb[0].mxu0
    %1033 = vmatprep.mubr.f32.mxu0 0.0
    %1034 = vmatmul.mubr.f32.gmra.mrb[0].mxu0 %v905
    %v1035 = vpop.f32.mrb[0].mxu0
    %v1036 = vadd.f32 %v882, %v1035
    %v1037 = vpop.f32.mrb[0].mxu0
    %1038 = vmatprep.mubr.f32.mxu0 0.0
    %1039 = vmatmul.mubr.f32.gmra.mrb[0].mxu0 %v908
    %v1040 = vpop.f32.mrb[0].mxu0
    %v1041 = vadd.f32 %v882, %v1040
    %v1042 = vpop.f32.mrb[0].mxu0
    %1043 = vmatprep.mubr.f32.mxu0 0.0
    %1044 = vmatmul.mubr.f32.gmra.mrb[0].mxu0 %v911
    %v1045 = vpop.f32.mrb[0].mxu0
    %v1046 = vadd.f32 %v882, %v1045
    %v1047 = vpop.f32.mrb[0].mxu0
    %1048 = vmatprep.mubr.f32.mxu0 0.0
    %1049 = vmatmul.mubr.f32.gmra.mrb[0].mxu0 %v914
    %v1050 = vpop.f32.mrb[0].mxu0
    %v1051 = vadd.f32 %v882, %v1050
    %v1052 = vpop.f32.mrb[0].mxu0
    %1053 = vmatprep.mubr.f32.mxu0 0.0
    %1054 = vmatmul.mubr.f32.gmra.mrb[0].mxu0 %v917
    %v1055 = vpop.f32.mrb[0].mxu0
    %v1056 = vadd.f32 %v882, %v1055
    %v1057 = vpop.f32.mrb[0].mxu0
    %1058 = vmatprep.mubr.f32.mxu0 0.0
    %1059 = vmatmul.mubr.f32.gmra.mrb[0].mxu0 %v920
    %v1060 = vpop.f32.mrb[0].mxu0
    %v1061 = vadd.f32 %v882, %v1060
    %v1062 = vpop.f32.mrb[0].mxu0
    %1063 = vmatprep.mubr.f32.mxu0 0.0
    %1064 = vmatmul.mubr.f32.gmra.mrb[0].mxu0 %v923
    %v1065 = vpop.f32.mrb[0].mxu0
    %v1066 = vadd.f32 %v882, %v1065
    %v1067 = vpop.f32.mrb[0].mxu0
    %1068 = vmatprep.mubr.f32.mxu0 0.0
    %1069 = vmatmul.mubr.f32.gmra.mrb[0].mxu0 %v926
    %v1070 = vpop.f32.mrb[0].mxu0
    %v1071 = vadd.f32 %v882, %v1070
    %v1072 = vpop.f32.mrb[0].mxu0
    %1073 = vmatprep.mubr.f32.mxu0 0.0
    %1074 = vmatmul.mubr.f32.gmra.mrb[0].mxu0 %v929
    %v1075 = vpop.f32.mrb[0].mxu0
    %v1076 = vadd.f32 %v882, %v1075
    %v1077 = vpop.f32.mrb[0].mxu0
    %1078 = vdwg.mxu0
    %vm1079 = vcmask 64512
    %v1081 = vsel %vm1079, %v1001, 0
    %v1084 = vsel %vm1079, %v1006, 0
    %v1087 = vsel %vm1079, %v1011, 0
    %v1090 = vsel %vm1079, %v1016, 0
    %v1093 = vsel %vm1079, %v1021, 0
    %v1096 = vsel %vm1079, %v1026, 0
    %v1099 = vsel %vm1079, %v1031, 0
    %v1102 = vsel %vm1079, %v1036, 0
    %v1105 = vsel %vm1079, %v1041, 0
    %v1108 = vsel %vm1079, %v1046, 0
    %v1111 = vsel %vm1079, %v1051, 0
    %v1114 = vsel %vm1079, %v1056, 0
    %v1117 = vsel %vm1079, %v1061, 0
    %v1120 = vsel %vm1079, %v1066, 0
    %v1123 = vsel %vm1079, %v1071, 0
    %v1126 = vsel %vm1079, %v1076, 0
    %1128 = vmatprep.subr.mxu0 0.0
    %1129 = vmatpush1.msra.mxu0 %v34
    %1130 = vmatprep.subr.mxu0 0.0
    %1131 = vmatpush1.msra.mxu0 0.0
    %1132 = vmatprep.subr.mxu0 0.0
    %1133 = vmatpush1.msra.mxu0 0.0
    %1134 = vmatprep.subr.mxu0 0.0
    %1135 = vmatpush1.msra.mxu0 0.0
    %1136 = vmatprep.subr.mxu0 0.0
    %1137 = vmatpush1.msra.mxu0 0.0
    %1138 = vmatprep.subr.mxu0 0.0
    %1139 = vmatpush1.msra.mxu0 0.0
    %1140 = vmatprep.subr.mxu0 0.0
    %1141 = vmatpush1.msra.mxu0 0.0
    %1142 = vmatprep.subr.mxu0 0.0
    %1143 = vmatpush1.msra.mxu0 0.0
    %1144 = vmatprep.subr.mxu0 0.0
    %1145 = vmatpush1.msra.mxu0 0.0
    %1146 = vmatprep.subr.mxu0 0.0
    %1147 = vmatpush1.msra.mxu0 0.0
    %1148 = vmatprep.subr.mxu0 0.0
    %1149 = vmatpush1.msra.mxu0 0.0
    %1150 = vmatprep.subr.mxu0 0.0
    %1151 = vmatpush1.msra.mxu0 0.0
    %1152 = vmatprep.subr.mxu0 0.0
    %1153 = vmatpush1.msra.mxu0 0.0
    %1154 = vmatprep.subr.mxu0 0.0
    %1155 = vmatpush1.msra.mxu0 0.0
    %1156 = vmatprep.subr.mxu0 0.0
    %1157 = vmatpush1.msra.mxu0 0.0
    %1158 = vmatprep.subr.mxu0 0.0
    %1159 = vmatpush1.msra.mxu0 0.0
    %1160 = vmatprep.subr.mxu0 0.0
    %1161 = vmatpush1.msra.mxu0 0.0
    %1162 = vmatprep.subr.mxu0 0.0
    %1163 = vmatpush1.msra.mxu0 0.0
    %1164 = vmatprep.subr.mxu0 0.0
    %1165 = vmatpush1.msra.mxu0 0.0
    %1166 = vmatprep.subr.mxu0 0.0
    %1167 = vmatpush1.msra.mxu0 0.0
    %1168 = vmatprep.subr.mxu0 0.0
    %1169 = vmatpush1.msra.mxu0 0.0
    %1170 = vmatprep.subr.mxu0 0.0
    %1171 = vmatpush1.msra.mxu0 0.0
    %1172 = vmatprep.subr.mxu0 0.0
    %1173 = vmatpush1.msra.mxu0 0.0
    %1174 = vmatprep.subr.mxu0 0.0
    %1175 = vmatpush1.msra.mxu0 0.0
    %1176 = vmatprep.subr.mxu0 0.0
    %1177 = vmatpush1.msra.mxu0 0.0
    %1178 = vmatprep.subr.mxu0 0.0
    %1179 = vmatpush1.msra.mxu0 0.0
    %1180 = vmatprep.subr.mxu0 0.0
    %1181 = vmatpush1.msra.mxu0 0.0
    %1182 = vmatprep.subr.mxu0 0.0
    %1183 = vmatpush1.msra.mxu0 0.0
    %1184 = vmatprep.subr.mxu0 0.0
    %1185 = vmatpush1.msra.mxu0 0.0
    %1186 = vmatprep.subr.mxu0 0.0
    %1187 = vmatpush1.msra.mxu0 0.0
    %1188 = vmatprep.subr.mxu0 0.0
    %1189 = vmatpush1.msra.mxu0 0.0
    %1190 = vmatprep.subr.mxu0 0.0
    %1191 = vmatpush1.msra.mxu0 0.0
    %1192 = vmatprep.mubr.f32.mxu0 0.0
    %1193 = vmatmul.mubr.f32.gmra.mrb[0].mxu0 %v1081
    %v1194 = vpop.f32.mrb[0].mxu0
    %v1195 = vadd.f32 0.0, %v1194
    %v1196 = vpop.f32.mrb[0].mxu0
    %1197 = vmatprep.mubr.f32.mxu0 0.0
    %1198 = vmatmul.mubr.f32.gmra.mrb[0].mxu0 %v1084
    %v1199 = vpop.f32.mrb[0].mxu0
    %v1200 = vadd.f32 0.0, %v1199
    %v1201 = vpop.f32.mrb[0].mxu0
    %1202 = vmatprep.mubr.f32.mxu0 0.0
    %1203 = vmatmul.mubr.f32.gmra.mrb[0].mxu0 %v1087
    %v1204 = vpop.f32.mrb[0].mxu0
    %v1205 = vadd.f32 0.0, %v1204
    %v1206 = vpop.f32.mrb[0].mxu0
    %1207 = vmatprep.mubr.f32.mxu0 0.0
    %1208 = vmatmul.mubr.f32.gmra.mrb[0].mxu0 %v1090
    %v1209 = vpop.f32.mrb[0].mxu0
    %v1210 = vadd.f32 0.0, %v1209
    %v1211 = vpop.f32.mrb[0].mxu0
    %1212 = vmatprep.mubr.f32.mxu0 0.0
    %1213 = vmatmul.mubr.f32.gmra.mrb[0].mxu0 %v1093
    %v1214 = vpop.f32.mrb[0].mxu0
    %v1215 = vadd.f32 0.0, %v1214
    %v1216 = vpop.f32.mrb[0].mxu0
    %1217 = vmatprep.mubr.f32.mxu0 0.0
    %1218 = vmatmul.mubr.f32.gmra.mrb[0].mxu0 %v1096
    %v1219 = vpop.f32.mrb[0].mxu0
    %v1220 = vadd.f32 0.0, %v1219
    %v1221 = vpop.f32.mrb[0].mxu0
    %1222 = vmatprep.mubr.f32.mxu0 0.0
    %1223 = vmatmul.mubr.f32.gmra.mrb[0].mxu0 %v1099
    %v1224 = vpop.f32.mrb[0].mxu0
    %v1225 = vadd.f32 0.0, %v1224
    %v1226 = vpop.f32.mrb[0].mxu0
    %1227 = vmatprep.mubr.f32.mxu0 0.0
    %1228 = vmatmul.mubr.f32.gmra.mrb[0].mxu0 %v1102
    %v1229 = vpop.f32.mrb[0].mxu0
    %v1230 = vadd.f32 0.0, %v1229
    %v1231 = vpop.f32.mrb[0].mxu0
    %1232 = vmatprep.mubr.f32.mxu0 0.0
    %1233 = vmatmul.mubr.f32.gmra.mrb[0].mxu0 %v1105
    %v1234 = vpop.f32.mrb[0].mxu0
    %v1235 = vadd.f32 0.0, %v1234
    %v1236 = vpop.f32.mrb[0].mxu0
    %1237 = vmatprep.mubr.f32.mxu0 0.0
    %1238 = vmatmul.mubr.f32.gmra.mrb[0].mxu0 %v1108
    %v1239 = vpop.f32.mrb[0].mxu0
    %v1240 = vadd.f32 0.0, %v1239
    %v1241 = vpop.f32.mrb[0].mxu0
    %1242 = vmatprep.mubr.f32.mxu0 0.0
    %1243 = vmatmul.mubr.f32.gmra.mrb[0].mxu0 %v1111
    %v1244 = vpop.f32.mrb[0].mxu0
    %v1245 = vadd.f32 0.0, %v1244
    %v1246 = vpop.f32.mrb[0].mxu0
    %1247 = vmatprep.mubr.f32.mxu0 0.0
    %1248 = vmatmul.mubr.f32.gmra.mrb[0].mxu0 %v1114
    %v1249 = vpop.f32.mrb[0].mxu0
    %v1250 = vadd.f32 0.0, %v1249
    %v1251 = vpop.f32.mrb[0].mxu0
    %1252 = vmatprep.mubr.f32.mxu0 0.0
    %1253 = vmatmul.mubr.f32.gmra.mrb[0].mxu0 %v1117
    %v1254 = vpop.f32.mrb[0].mxu0
    %v1255 = vadd.f32 0.0, %v1254
    %v1256 = vpop.f32.mrb[0].mxu0
    %1257 = vmatprep.mubr.f32.mxu0 0.0
    %1258 = vmatmul.mubr.f32.gmra.mrb[0].mxu0 %v1120
    %v1259 = vpop.f32.mrb[0].mxu0
    %v1260 = vadd.f32 0.0, %v1259
    %v1261 = vpop.f32.mrb[0].mxu0
    %1262 = vmatprep.mubr.f32.mxu0 0.0
    %1263 = vmatmul.mubr.f32.gmra.mrb[0].mxu0 %v1123
    %v1264 = vpop.f32.mrb[0].mxu0
    %v1265 = vadd.f32 0.0, %v1264
    %v1266 = vpop.f32.mrb[0].mxu0
    %1267 = vmatprep.mubr.f32.mxu0 0.0
    %1268 = vmatmul.mubr.f32.gmra.mrb[0].mxu0 %v1126
    %v1269 = vpop.f32.mrb[0].mxu0
    %v1270 = vadd.f32 0.0, %v1269
    %v1271 = vpop.f32.mrb[0].mxu0
    %1272 = vdwg.mxu0
    %v1274 = vsel %vm123, %v624, 0
    %v1277 = vsel %vm123, %v629, 0
    %v1280 = vsel %vm123, %v634, 0
    %v1283 = vsel %vm123, %v639, 0
    %v1286 = vsel %vm123, %v644, 0
    %v1289 = vsel %vm123, %v649, 0
    %v1292 = vsel %vm123, %v654, 0
    %v1295 = vsel %vm123, %v659, 0
    %v1298 = vsel %vm123, %v664, 0
    %v1301 = vsel %vm123, %v669, 0
    %v1304 = vsel %vm123, %v674, 0
    %v1307 = vsel %vm123, %v679, 0
    %v1310 = vsel %vm123, %v684, 0
    %v1313 = vsel %vm123, %v689, 0
    %v1316 = vsel %vm123, %v694, 0
    %v1319 = vsel %vm123, %v699, 0
    %1321 = vmatprep.subr.mxu0 0.0
    %1322 = vmatpush1.xpose.msra.mxu0 %v1274
    %1323 = vmatprep.subr.mxu0 0.0
    %1324 = vmatpush1.xpose.msra.mxu0 %v1277
    %1325 = vmatprep.subr.mxu0 0.0
    %1326 = vmatpush1.xpose.msra.mxu0 %v1280
    %1327 = vmatprep.subr.mxu0 0.0
    %1328 = vmatpush1.xpose.msra.mxu0 %v1283
    %1329 = vmatprep.subr.mxu0 0.0
    %1330 = vmatpush1.xpose.msra.mxu0 %v1286
    %1331 = vmatprep.subr.mxu0 0.0
    %1332 = vmatpush1.xpose.msra.mxu0 %v1289
    %1333 = vmatprep.subr.mxu0 0.0
    %1334 = vmatpush1.xpose.msra.mxu0 %v1292
    %1335 = vmatprep.subr.mxu0 0.0
    %1336 = vmatpush1.xpose.msra.mxu0 %v1295
    %1337 = vmatprep.subr.mxu0 0.0
    %1338 = vmatpush1.xpose.msra.mxu0 %v1298
    %1339 = vmatprep.subr.mxu0 0.0
    %1340 = vmatpush1.xpose.msra.mxu0 %v1301
    %1341 = vmatprep.subr.mxu0 0.0
    %1342 = vmatpush1.xpose.msra.mxu0 %v1304
    %1343 = vmatprep.subr.mxu0 0.0
    %1344 = vmatpush1.xpose.msra.mxu0 %v1307
    %1345 = vmatprep.subr.mxu0 0.0
    %1346 = vmatpush1.xpose.msra.mxu0 %v1310
    %1347 = vmatprep.subr.mxu0 0.0
    %1348 = vmatpush1.xpose.msra.mxu0 %v1313
    %1349 = vmatprep.subr.mxu0 0.0
    %1350 = vmatpush1.xpose.msra.mxu0 %v1316
    %1351 = vmatprep.subr.mxu0 0.0
    %1352 = vmatpush1.xpose.msra.mxu0 %v1319
    %1353 = vmatprep.subr.mxu0 0.0
    %1354 = vmatpush1.xpose.msra.mxu0 0.0
    %1355 = vmatprep.subr.mxu0 0.0
    %1356 = vmatpush1.xpose.msra.mxu0 0.0
    %1357 = vmatprep.subr.mxu0 0.0
    %1358 = vmatpush1.xpose.msra.mxu0 0.0
    %1359 = vmatprep.subr.mxu0 0.0
    %1360 = vmatpush1.xpose.msra.mxu0 0.0
    %1361 = vmatprep.subr.mxu0 0.0
    %1362 = vmatpush1.xpose.msra.mxu0 0.0
    %1363 = vmatprep.subr.mxu0 0.0
    %1364 = vmatpush1.xpose.msra.mxu0 0.0
    %1365 = vmatprep.subr.mxu0 0.0
    %1366 = vmatpush1.xpose.msra.mxu0 0.0
    %1367 = vmatprep.subr.mxu0 0.0
    %1368 = vmatpush1.xpose.msra.mxu0 0.0
    %1369 = vmatprep.subr.mxu0 0.0
    %1370 = vmatpush1.xpose.msra.mxu0 0.0
    %1371 = vmatprep.subr.mxu0 0.0
    %1372 = vmatpush1.xpose.msra.mxu0 0.0
    %1373 = vmatprep.subr.mxu0 0.0
    %1374 = vmatpush1.xpose.msra.mxu0 0.0
    %1375 = vmatprep.subr.mxu0 0.0
    %1376 = vmatpush1.xpose.msra.mxu0 0.0
    %1377 = vmatprep.subr.mxu0 0.0
    %1378 = vmatpush1.xpose.msra.mxu0 0.0
    %1379 = vmatprep.subr.mxu0 0.0
    %1380 = vmatpush1.xpose.msra.mxu0 0.0
    %1381 = vmatprep.subr.mxu0 0.0
    %1382 = vmatpush1.xpose.msra.mxu0 0.0
    %1383 = vmatprep.subr.mxu0 0.0
    %1384 = vmatpush1.xpose.msra.mxu0 0.0
    %1385 = vmatprep.mubr.f32.mxu0 0.0
    %1386 = vmatmul.mubr.f32.gmra.mrb[0].mxu0 %v884
    %v1387 = vpop.f32.mrb[0].mxu0
    %v1388 = vadd.f32 %v1195, %v1387
    %v1389 = vpop.f32.mrb[0].mxu0
    %1390 = vmatprep.mubr.f32.mxu0 0.0
    %1391 = vmatmul.mubr.f32.gmra.mrb[0].mxu0 %v887
    %v1392 = vpop.f32.mrb[0].mxu0
    %v1393 = vadd.f32 %v1200, %v1392
    %v1394 = vpop.f32.mrb[0].mxu0
    %1395 = vmatprep.mubr.f32.mxu0 0.0
    %1396 = vmatmul.mubr.f32.gmra.mrb[0].mxu0 %v890
    %v1397 = vpop.f32.mrb[0].mxu0
    %v1398 = vadd.f32 %v1205, %v1397
    %v1399 = vpop.f32.mrb[0].mxu0
    %1400 = vmatprep.mubr.f32.mxu0 0.0
    %1401 = vmatmul.mubr.f32.gmra.mrb[0].mxu0 %v893
    %v1402 = vpop.f32.mrb[0].mxu0
    %v1403 = vadd.f32 %v1210, %v1402
    %v1404 = vpop.f32.mrb[0].mxu0
    %1405 = vmatprep.mubr.f32.mxu0 0.0
    %1406 = vmatmul.mubr.f32.gmra.mrb[0].mxu0 %v896
    %v1407 = vpop.f32.mrb[0].mxu0
    %v1408 = vadd.f32 %v1215, %v1407
    %v1409 = vpop.f32.mrb[0].mxu0
    %1410 = vmatprep.mubr.f32.mxu0 0.0
    %1411 = vmatmul.mubr.f32.gmra.mrb[0].mxu0 %v899
    %v1412 = vpop.f32.mrb[0].mxu0
    %v1413 = vadd.f32 %v1220, %v1412
    %v1414 = vpop.f32.mrb[0].mxu0
    %1415 = vmatprep.mubr.f32.mxu0 0.0
    %1416 = vmatmul.mubr.f32.gmra.mrb[0].mxu0 %v902
    %v1417 = vpop.f32.mrb[0].mxu0
    %v1418 = vadd.f32 %v1225, %v1417
    %v1419 = vpop.f32.mrb[0].mxu0
    %1420 = vmatprep.mubr.f32.mxu0 0.0
    %1421 = vmatmul.mubr.f32.gmra.mrb[0].mxu0 %v905
    %v1422 = vpop.f32.mrb[0].mxu0
    %v1423 = vadd.f32 %v1230, %v1422
    %v1424 = vpop.f32.mrb[0].mxu0
    %1425 = vmatprep.mubr.f32.mxu0 0.0
    %1426 = vmatmul.mubr.f32.gmra.mrb[0].mxu0 %v908
    %v1427 = vpop.f32.mrb[0].mxu0
    %v1428 = vadd.f32 %v1235, %v1427
    %v1429 = vpop.f32.mrb[0].mxu0
    %1430 = vmatprep.mubr.f32.mxu0 0.0
    %1431 = vmatmul.mubr.f32.gmra.mrb[0].mxu0 %v911
    %v1432 = vpop.f32.mrb[0].mxu0
    %v1433 = vadd.f32 %v1240, %v1432
    %v1434 = vpop.f32.mrb[0].mxu0
    %1435 = vmatprep.mubr.f32.mxu0 0.0
    %1436 = vmatmul.mubr.f32.gmra.mrb[0].mxu0 %v914
    %v1437 = vpop.f32.mrb[0].mxu0
    %v1438 = vadd.f32 %v1245, %v1437
    %v1439 = vpop.f32.mrb[0].mxu0
    %1440 = vmatprep.mubr.f32.mxu0 0.0
    %1441 = vmatmul.mubr.f32.gmra.mrb[0].mxu0 %v917
    %v1442 = vpop.f32.mrb[0].mxu0
    %v1443 = vadd.f32 %v1250, %v1442
    %v1444 = vpop.f32.mrb[0].mxu0
    %1445 = vmatprep.mubr.f32.mxu0 0.0
    %1446 = vmatmul.mubr.f32.gmra.mrb[0].mxu0 %v920
    %v1447 = vpop.f32.mrb[0].mxu0
    %v1448 = vadd.f32 %v1255, %v1447
    %v1449 = vpop.f32.mrb[0].mxu0
    %1450 = vmatprep.mubr.f32.mxu0 0.0
    %1451 = vmatmul.mubr.f32.gmra.mrb[0].mxu0 %v923
    %v1452 = vpop.f32.mrb[0].mxu0
    %v1453 = vadd.f32 %v1260, %v1452
    %v1454 = vpop.f32.mrb[0].mxu0
    %1455 = vmatprep.mubr.f32.mxu0 0.0
    %1456 = vmatmul.mubr.f32.gmra.mrb[0].mxu0 %v926
    %v1457 = vpop.f32.mrb[0].mxu0
    %v1458 = vadd.f32 %v1265, %v1457
    %v1459 = vpop.f32.mrb[0].mxu0
    %1460 = vmatprep.mubr.f32.mxu0 0.0
    %1461 = vmatmul.mubr.f32.gmra.mrb[0].mxu0 %v929
    %v1462 = vpop.f32.mrb[0].mxu0
    %v1463 = vadd.f32 %v1270, %v1462
    %v1464 = vpop.f32.mrb[0].mxu0
    %1465 = vdwg.mxu0
    %v1466 = vadd.f32 %v1388, %v69
    %v1467 = vadd.f32 %v1393, %v70
    %v1468 = vadd.f32 %v1398, %v71
    %v1469 = vadd.f32 %v1403, %v72
    %v1470 = vadd.f32 %v1408, %v73
    %v1471 = vadd.f32 %v1413, %v74
    %v1472 = vadd.f32 %v1418, %v75
    %v1473 = vadd.f32 %v1423, %v76
    %v1474 = vadd.f32 %v1428, %v77
    %v1475 = vadd.f32 %v1433, %v78
    %v1476 = vadd.f32 %v1438, %v79
    %v1477 = vadd.f32 %v1443, %v80
    %v1478 = vadd.f32 %v1448, %v81
    %v1479 = vadd.f32 %v1453, %v82
    %v1480 = vadd.f32 %v1458, %v83
    %v1481 = vadd.f32 %v1463, %v84
    %1482 = vmax.xlane.f32.xlu0 %v1466
    %v1483 = vpop.xlane.xlu0 %1482
    %1484 = vmax.xlane.f32.xlu0 %v1467
    %v1485 = vpop.xlane.xlu0 %1484
    %1486 = vmax.xlane.f32.xlu0 %v1468
    %v1487 = vpop.xlane.xlu0 %1486
    %1488 = vmax.xlane.f32.xlu0 %v1469
    %v1489 = vpop.xlane.xlu0 %1488
    %1490 = vmax.xlane.f32.xlu0 %v1470
    %v1491 = vpop.xlane.xlu0 %1490
    %1492 = vmax.xlane.f32.xlu0 %v1471
    %v1493 = vpop.xlane.xlu0 %1492
    %1494 = vmax.xlane.f32.xlu0 %v1472
    %v1495 = vpop.xlane.xlu0 %1494
    %1496 = vmax.xlane.f32.xlu0 %v1473
    %v1497 = vpop.xlane.xlu0 %1496
    %1498 = vmax.xlane.f32.xlu0 %v1474
    %v1499 = vpop.xlane.xlu0 %1498
    %1500 = vmax.xlane.f32.xlu0 %v1475
    %v1501 = vpop.xlane.xlu0 %1500
    %1502 = vmax.xlane.f32.xlu0 %v1476
    %v1503 = vpop.xlane.xlu0 %1502
    %1504 = vmax.xlane.f32.xlu0 %v1477
    %v1505 = vpop.xlane.xlu0 %1504
    %1506 = vmax.xlane.f32.xlu0 %v1478
    %v1507 = vpop.xlane.xlu0 %1506
    %1508 = vmax.xlane.f32.xlu0 %v1479
    %v1509 = vpop.xlane.xlu0 %1508
    %1510 = vmax.xlane.f32.xlu0 %v1480
    %v1511 = vpop.xlane.xlu0 %1510
    %1512 = vmax.xlane.f32.xlu0 %v1481
    %v1513 = vpop.xlane.xlu0 %1512
    %v1514 = vsub.f32 %v1466, %v1483
    %v1515 = vsub.f32 %v1467, %v1485
    %v1516 = vsub.f32 %v1468, %v1487
    %v1517 = vsub.f32 %v1469, %v1489
    %v1518 = vsub.f32 %v1470, %v1491
    %v1519 = vsub.f32 %v1471, %v1493
    %v1520 = vsub.f32 %v1472, %v1495
    %v1521 = vsub.f32 %v1473, %v1497
    %v1522 = vsub.f32 %v1474, %v1499
    %v1523 = vsub.f32 %v1475, %v1501
    %v1524 = vsub.f32 %v1476, %v1503
    %v1525 = vsub.f32 %v1477, %v1505
    %v1526 = vsub.f32 %v1478, %v1507
    %v1527 = vsub.f32 %v1479, %v1509
    %v1528 = vsub.f32 %v1480, %v1511
    %v1529 = vsub.f32 %v1481, %v1513
    %v1530 = vmul.f32 %v1514, 1.442695
    %v1531 = vpow.pop %v1530
    %v1532 = vmul.f32 %v1515, 1.442695
    %v1533 = vpow.pop %v1532
    %v1534 = vmul.f32 %v1516, 1.442695
    %v1535 = vpow.pop %v1534
    %v1536 = vmul.f32 %v1517, 1.442695
    %v1537 = vpow.pop %v1536
    %v1538 = vmul.f32 %v1518, 1.442695
    %v1539 = vpow.pop %v1538
    %v1540 = vmul.f32 %v1519, 1.442695
    %v1541 = vpow.pop %v1540
    %v1542 = vmul.f32 %v1520, 1.442695
    %v1543 = vpow.pop %v1542
    %v1544 = vmul.f32 %v1521, 1.442695
    %v1545 = vpow.pop %v1544
    %v1546 = vmul.f32 %v1522, 1.442695
    %v1547 = vpow.pop %v1546
    %v1548 = vmul.f32 %v1523, 1.442695
    %v1549 = vpow.pop %v1548
    %v1550 = vmul.f32 %v1524, 1.442695
    %v1551 = vpow.pop %v1550
    %v1552 = vmul.f32 %v1525, 1.442695
    %v1553 = vpow.pop %v1552
    %v1554 = vmul.f32 %v1526, 1.442695
    %v1555 = vpow.pop %v1554
    %v1556 = vmul.f32 %v1527, 1.442695
    %v1557 = vpow.pop %v1556
    %v1558 = vmul.f32 %v1528, 1.442695
    %v1559 = vpow.pop %v1558
    %v1560 = vmul.f32 %v1529, 1.442695
    %v1561 = vpow.pop %v1560
    %1562 = vadd.xlane.f32.xlu0 %v1531
    %v1563 = vpop.xlane.xlu0 %1562
    %1564 = vadd.xlane.f32.xlu0 %v1533
    %v1565 = vpop.xlane.xlu0 %1564
    %1566 = vadd.xlane.f32.xlu0 %v1535
    %v1567 = vpop.xlane.xlu0 %1566
    %1568 = vadd.xlane.f32.xlu0 %v1537
    %v1569 = vpop.xlane.xlu0 %1568
    %1570 = vadd.xlane.f32.xlu0 %v1539
    %v1571 = vpop.xlane.xlu0 %1570
    %1572 = vadd.xlane.f32.xlu0 %v1541
    %v1573 = vpop.xlane.xlu0 %1572
    %1574 = vadd.xlane.f32.xlu0 %v1543
    %v1575 = vpop.xlane.xlu0 %1574
    %1576 = vadd.xlane.f32.xlu0 %v1545
    %v1577 = vpop.xlane.xlu0 %1576
    %1578 = vadd.xlane.f32.xlu0 %v1547
    %v1579 = vpop.xlane.xlu0 %1578
    %1580 = vadd.xlane.f32.xlu0 %v1549
    %v1581 = vpop.xlane.xlu0 %1580
    %1582 = vadd.xlane.f32.xlu0 %v1551
    %v1583 = vpop.xlane.xlu0 %1582
    %1584 = vadd.xlane.f32.xlu0 %v1553
    %v1585 = vpop.xlane.xlu0 %1584
    %1586 = vadd.xlane.f32.xlu0 %v1555
    %v1587 = vpop.xlane.xlu0 %1586
    %1588 = vadd.xlane.f32.xlu0 %v1557
    %v1589 = vpop.xlane.xlu0 %1588
    %1590 = vadd.xlane.f32.xlu0 %v1559
    %v1591 = vpop.xlane.xlu0 %1590
    %1592 = vadd.xlane.f32.xlu0 %v1561
    %v1593 = vpop.xlane.xlu0 %1592
    %v1594 = vrcp.pop %v1563
    %v1595 = vmul.f32 %v1531, %v1594
    %v1596 = vrcp.pop %v1565
    %v1597 = vmul.f32 %v1533, %v1596
    %v1598 = vrcp.pop %v1567
    %v1599 = vmul.f32 %v1535, %v1598
    %v1600 = vrcp.pop %v1569
    %v1601 = vmul.f32 %v1537, %v1600
    %v1602 = vrcp.pop %v1571
    %v1603 = vmul.f32 %v1539, %v1602
    %v1604 = vrcp.pop %v1573
    %v1605 = vmul.f32 %v1541, %v1604
    %v1606 = vrcp.pop %v1575
    %v1607 = vmul.f32 %v1543, %v1606
    %v1608 = vrcp.pop %v1577
    %v1609 = vmul.f32 %v1545, %v1608
    %v1610 = vrcp.pop %v1579
    %v1611 = vmul.f32 %v1547, %v1610
    %v1612 = vrcp.pop %v1581
    %v1613 = vmul.f32 %v1549, %v1612
    %v1614 = vrcp.pop %v1583
    %v1615 = vmul.f32 %v1551, %v1614
    %v1616 = vrcp.pop %v1585
    %v1617 = vmul.f32 %v1553, %v1616
    %v1618 = vrcp.pop %v1587
    %v1619 = vmul.f32 %v1555, %v1618
    %v1620 = vrcp.pop %v1589
    %v1621 = vmul.f32 %v1557, %v1620
    %v1622 = vrcp.pop %v1591
    %v1623 = vmul.f32 %v1559, %v1622
    %v1624 = vrcp.pop %v1593
    %v1625 = vmul.f32 %v1561, %v1624
    %1626 = vst [vmem:[%s9] sm:$0xff] %v1595
    %1627 = vst [vmem:[%s9 + $0x8] sm:$0xff] %v1597
    %1628 = vst [vmem:[%s9 + $0x10] sm:$0xff] %v1599
    %1629 = vst [vmem:[%s9 + $0x18] sm:$0xff] %v1601
    %1630 = vst [vmem:[%s9 + $0x20] sm:$0xff] %v1603
    %1631 = vst [vmem:[%s9 + $0x28] sm:$0xff] %v1605
    %1632 = vst [vmem:[%s9 + $0x30] sm:$0xff] %v1607
    %1633 = vst [vmem:[%s9 + $0x38] sm:$0xff] %v1609
    %1634 = vst [vmem:[%s9 + $0x40] sm:$0xff] %v1611
    %1635 = vst [vmem:[%s9 + $0x48] sm:$0xff] %v1613
    %1636 = vst [vmem:[%s9 + $0x50] sm:$0xff] %v1615
    %1637 = vst [vmem:[%s9 + $0x58] sm:$0xff] %v1617
    %1638 = vst [vmem:[%s9 + $0x60] sm:$0xff] %v1619
    %1639 = vst [vmem:[%s9 + $0x68] sm:$0xff] %v1621
    %1640 = vst [vmem:[%s9 + $0x70] sm:$0xff] %v1623
    %1641 = vst [vmem:[%s9 + $0x78] sm:$0xff] %v1625
    %1642 = vmatprep.subr.mxu0 0.0
    %1643 = vmatpush1.msra.mxu0 %v863
    %1644 = vmatprep.subr.mxu0 0.0
    %1645 = vmatpush1.msra.mxu0 %v864
    %1646 = vmatprep.subr.mxu0 0.0
    %1647 = vmatpush1.msra.mxu0 %v865
    %1648 = vmatprep.subr.mxu0 0.0
    %1649 = vmatpush1.msra.mxu0 %v866
    %1650 = vmatprep.subr.mxu0 0.0
    %1651 = vmatpush1.msra.mxu0 %v867
    %1652 = vmatprep.subr.mxu0 0.0
    %1653 = vmatpush1.msra.mxu0 %v868
    %1654 = vmatprep.subr.mxu0 0.0
    %1655 = vmatpush1.msra.mxu0 %v869
    %1656 = vmatprep.subr.mxu0 0.0
    %1657 = vmatpush1.msra.mxu0 %v870
    %1658 = vmatprep.subr.mxu0 0.0
    %1659 = vmatpush1.msra.mxu0 %v871
    %1660 = vmatprep.subr.mxu0 0.0
    %1661 = vmatpush1.msra.mxu0 %v872
    %1662 = vmatprep.subr.mxu0 0.0
    %1663 = vmatpush1.msra.mxu0 %v873
    %1664 = vmatprep.subr.mxu0 0.0
    %1665 = vmatpush1.msra.mxu0 %v874
    %1666 = vmatprep.subr.mxu0 0.0
    %1667 = vmatpush1.msra.mxu0 %v875
    %1668 = vmatprep.subr.mxu0 0.0
    %1669 = vmatpush1.msra.mxu0 %v876
    %1670 = vmatprep.subr.mxu0 0.0
    %1671 = vmatpush1.msra.mxu0 %v877
    %1672 = vmatprep.subr.mxu0 0.0
    %1673 = vmatpush1.msra.mxu0 %v878
    %1674 = vmatprep.subr.mxu0 0.0
    %1675 = vmatpush1.msra.mxu0 0.0
    %1676 = vmatprep.subr.mxu0 0.0
    %1677 = vmatpush1.msra.mxu0 0.0
    %1678 = vmatprep.subr.mxu0 0.0
    %1679 = vmatpush1.msra.mxu0 0.0
    %1680 = vmatprep.subr.mxu0 0.0
    %1681 = vmatpush1.msra.mxu0 0.0
    %1682 = vmatprep.subr.mxu0 0.0
    %1683 = vmatpush1.msra.mxu0 0.0
    %1684 = vmatprep.subr.mxu0 0.0
    %1685 = vmatpush1.msra.mxu0 0.0
    %1686 = vmatprep.subr.mxu0 0.0
    %1687 = vmatpush1.msra.mxu0 0.0
    %1688 = vmatprep.subr.mxu0 0.0
    %1689 = vmatpush1.msra.mxu0 0.0
    %1690 = vmatprep.subr.mxu0 0.0
    %1691 = vmatpush1.msra.mxu0 0.0
    %1692 = vmatprep.subr.mxu0 0.0
    %1693 = vmatpush1.msra.mxu0 0.0
    %1694 = vmatprep.subr.mxu0 0.0
    %1695 = vmatpush1.msra.mxu0 0.0
    %1696 = vmatprep.subr.mxu0 0.0
    %1697 = vmatpush1.msra.mxu0 0.0
    %1698 = vmatprep.subr.mxu0 0.0
    %1699 = vmatpush1.msra.mxu0 0.0
    %1700 = vmatprep.subr.mxu0 0.0
    %1701 = vmatpush1.msra.mxu0 0.0
    %1702 = vmatprep.subr.mxu0 0.0
    %1703 = vmatpush1.msra.mxu0 0.0
    %1704 = vmatprep.subr.mxu0 0.0
    %1705 = vmatpush1.msra.mxu0 0.0
    %1706 = vmatprep.mubr.f32.mxu0 0.0
    %1707 = vmatmul.mubr.f32.gmra.mrb[0].mxu0 %v1595
    %v1708 = vpop.f32.mrb[0].mxu0
    %v1709 = vadd.f32 0.0, %v1708
    %v1710 = vpop.f32.mrb[0].mxu0
    %1711 = vmatprep.mubr.f32.mxu0 0.0
    %1712 = vmatmul.mubr.f32.gmra.mrb[0].mxu0 %v1597
    %v1713 = vpop.f32.mrb[0].mxu0
    %v1714 = vadd.f32 0.0, %v1713
    %v1715 = vpop.f32.mrb[0].mxu0
    %1716 = vmatprep.mubr.f32.mxu0 0.0
    %1717 = vmatmul.mubr.f32.gmra.mrb[0].mxu0 %v1599
    %v1718 = vpop.f32.mrb[0].mxu0
    %v1719 = vadd.f32 0.0, %v1718
    %v1720 = vpop.f32.mrb[0].mxu0
    %1721 = vmatprep.mubr.f32.mxu0 0.0
    %1722 = vmatmul.mubr.f32.gmra.mrb[0].mxu0 %v1601
    %v1723 = vpop.f32.mrb[0].mxu0
    %v1724 = vadd.f32 0.0, %v1723
    %v1725 = vpop.f32.mrb[0].mxu0
    %1726 = vmatprep.mubr.f32.mxu0 0.0
    %1727 = vmatmul.mubr.f32.gmra.mrb[0].mxu0 %v1603
    %v1728 = vpop.f32.mrb[0].mxu0
    %v1729 = vadd.f32 0.0, %v1728
    %v1730 = vpop.f32.mrb[0].mxu0
    %1731 = vmatprep.mubr.f32.mxu0 0.0
    %1732 = vmatmul.mubr.f32.gmra.mrb[0].mxu0 %v1605
    %v1733 = vpop.f32.mrb[0].mxu0
    %v1734 = vadd.f32 0.0, %v1733
    %v1735 = vpop.f32.mrb[0].mxu0
    %1736 = vmatprep.mubr.f32.mxu0 0.0
    %1737 = vmatmul.mubr.f32.gmra.mrb[0].mxu0 %v1607
    %v1738 = vpop.f32.mrb[0].mxu0
    %v1739 = vadd.f32 0.0, %v1738
    %v1740 = vpop.f32.mrb[0].mxu0
    %1741 = vmatprep.mubr.f32.mxu0 0.0
    %1742 = vmatmul.mubr.f32.gmra.mrb[0].mxu0 %v1609
    %v1743 = vpop.f32.mrb[0].mxu0
    %v1744 = vadd.f32 0.0, %v1743
    %v1745 = vpop.f32.mrb[0].mxu0
    %1746 = vmatprep.mubr.f32.mxu0 0.0
    %1747 = vmatmul.mubr.f32.gmra.mrb[0].mxu0 %v1611
    %v1748 = vpop.f32.mrb[0].mxu0
    %v1749 = vadd.f32 0.0, %v1748
    %v1750 = vpop.f32.mrb[0].mxu0
    %1751 = vmatprep.mubr.f32.mxu0 0.0
    %1752 = vmatmul.mubr.f32.gmra.mrb[0].mxu0 %v1613
    %v1753 = vpop.f32.mrb[0].mxu0
    %v1754 = vadd.f32 0.0, %v1753
    %v1755 = vpop.f32.mrb[0].mxu0
    %1756 = vmatprep.mubr.f32.mxu0 0.0
    %1757 = vmatmul.mubr.f32.gmra.mrb[0].mxu0 %v1615
    %v1758 = vpop.f32.mrb[0].mxu0
    %v1759 = vadd.f32 0.0, %v1758
    %v1760 = vpop.f32.mrb[0].mxu0
    %1761 = vmatprep.mubr.f32.mxu0 0.0
    %1762 = vmatmul.mubr.f32.gmra.mrb[0].mxu0 %v1617
    %v1763 = vpop.f32.mrb[0].mxu0
    %v1764 = vadd.f32 0.0, %v1763
    %v1765 = vpop.f32.mrb[0].mxu0
    %1766 = vmatprep.mubr.f32.mxu0 0.0
    %1767 = vmatmul.mubr.f32.gmra.mrb[0].mxu0 %v1619
    %v1768 = vpop.f32.mrb[0].mxu0
    %v1769 = vadd.f32 0.0, %v1768
    %v1770 = vpop.f32.mrb[0].mxu0
    %1771 = vmatprep.mubr.f32.mxu0 0.0
    %1772 = vmatmul.mubr.f32.gmra.mrb[0].mxu0 %v1621
    %v1773 = vpop.f32.mrb[0].mxu0
    %v1774 = vadd.f32 0.0, %v1773
    %v1775 = vpop.f32.mrb[0].mxu0
    %1776 = vmatprep.mubr.f32.mxu0 0.0
    %1777 = vmatmul.mubr.f32.gmra.mrb[0].mxu0 %v1623
    %v1778 = vpop.f32.mrb[0].mxu0
    %v1779 = vadd.f32 0.0, %v1778
    %v1780 = vpop.f32.mrb[0].mxu0
    %1781 = vmatprep.mubr.f32.mxu0 0.0
    %1782 = vmatmul.mubr.f32.gmra.mrb[0].mxu0 %v1625
    %v1783 = vpop.f32.mrb[0].mxu0
    %v1784 = vadd.f32 0.0, %v1783
    %v1785 = vpop.f32.mrb[0].mxu0
    %1786 = vdwg.mxu0
    %1787 = vmatprep.subr.mxu0 0.0
    %1788 = vmatpush1.msra.mxu0 %v1709
    %1789 = vmatprep.subr.mxu0 0.0
    %1790 = vmatpush1.msra.mxu0 %v1714
    %1791 = vmatprep.subr.mxu0 0.0
    %1792 = vmatpush1.msra.mxu0 %v1719
    %1793 = vmatprep.subr.mxu0 0.0
    %1794 = vmatpush1.msra.mxu0 %v1724
    %1795 = vmatprep.subr.mxu0 0.0
    %1796 = vmatpush1.msra.mxu0 %v1729
    %1797 = vmatprep.subr.mxu0 0.0
    %1798 = vmatpush1.msra.mxu0 %v1734
    %1799 = vmatprep.subr.mxu0 0.0
    %1800 = vmatpush1.msra.mxu0 %v1739
    %1801 = vmatprep.subr.mxu0 0.0
    %1802 = vmatpush1.msra.mxu0 %v1744
    %1803 = vmatprep.subr.mxu0 0.0
    %1804 = vmatpush1.msra.mxu0 %v1749
    %1805 = vmatprep.subr.mxu0 0.0
    %1806 = vmatpush1.msra.mxu0 %v1754
    %1807 = vmatprep.subr.mxu0 0.0
    %1808 = vmatpush1.msra.mxu0 %v1759
    %1809 = vmatprep.subr.mxu0 0.0
    %1810 = vmatpush1.msra.mxu0 %v1764
    %1811 = vmatprep.subr.mxu0 0.0
    %1812 = vmatpush1.msra.mxu0 %v1769
    %1813 = vmatprep.subr.mxu0 0.0
    %1814 = vmatpush1.msra.mxu0 %v1774
    %1815 = vmatprep.subr.mxu0 0.0
    %1816 = vmatpush1.msra.mxu0 %v1779
    %1817 = vmatprep.subr.mxu0 0.0
    %1818 = vmatpush1.msra.mxu0 %v1784
    %1819 = vmatprep.subr.mxu0 0.0
    %1820 = vmatpush1.msra.mxu0 0.0
    %1821 = vmatprep.subr.mxu0 0.0
    %1822 = vmatpush1.msra.mxu0 0.0
    %1823 = vmatprep.subr.mxu0 0.0
    %1824 = vmatpush1.msra.mxu0 0.0
    %1825 = vmatprep.subr.mxu0 0.0
    %1826 = vmatpush1.msra.mxu0 0.0
    %1827 = vmatprep.subr.mxu0 0.0
    %1828 = vmatpush1.msra.mxu0 0.0
    %1829 = vmatprep.subr.mxu0 0.0
    %1830 = vmatpush1.msra.mxu0 0.0
    %1831 = vmatprep.subr.mxu0 0.0
    %1832 = vmatpush1.msra.mxu0 0.0
    %1833 = vmatprep.subr.mxu0 0.0
    %1834 = vmatpush1.msra.mxu0 0.0
    %1835 = vmatprep.subr.mxu0 0.0
    %1836 = vmatpush1.msra.mxu0 0.0
    %1837 = vmatprep.subr.mxu0 0.0
    %1838 = vmatpush1.msra.mxu0 0.0
    %1839 = vmatprep.subr.mxu0 0.0
    %1840 = vmatpush1.msra.mxu0 0.0
    %1841 = vmatprep.subr.mxu0 0.0
    %1842 = vmatpush1.msra.mxu0 0.0
    %1843 = vmatprep.subr.mxu0 0.0
    %1844 = vmatpush1.msra.mxu0 0.0
    %1845 = vmatprep.subr.mxu0 0.0
    %1846 = vmatpush1.msra.mxu0 0.0
    %1847 = vmatprep.subr.mxu0 0.0
    %1848 = vmatpush1.msra.mxu0 0.0
    %1849 = vmatprep.subr.mxu0 0.0
    %1850 = vmatpush1.msra.mxu0 0.0
    %1851 = vmatprep.mubr.f32.mxu0 0.0
    %1852 = vmatmul.mubr.f32.gmra.mrb[0].mxu0 %v51
    %v1853 = vpop.f32.mrb[0].mxu0
    %v1854 = vadd.f32 0.0, %v1853
    %v1855 = vpop.f32.mrb[0].mxu0
    %1856 = vmatprep.mubr.f32.mxu0 0.0
    %1857 = vmatmul.mubr.f32.gmra.mrb[0].mxu0 %v52
    %v1858 = vpop.f32.mrb[0].mxu0
    %v1859 = vadd.f32 0.0, %v1858
    %v1860 = vpop.f32.mrb[0].mxu0
    %1861 = vdwg.mxu0
    %v1862 = vlaneseq
    %v1863 = vshrl.u32 %v1862, 7
    %v1864 = vsub.s32 3, %v1863
    %v1865 = vrot.slane %v118, %v1864
    %v1867 = vsel %vm123, %v1854, 0
    %v1870 = vsel %vm123, %v1859, 0
    %1872 = vmatprep.subr.mxu0 0.0
    %1873 = vmatpush1.msra.mxu0 %v109
    %1874 = vmatprep.subr.mxu0 0.0
    %1875 = vmatpush1.msra.mxu0 %v110
    %1876 = vmatprep.subr.mxu0 0.0
    %1877 = vmatpush1.msra.mxu0 %v111
    %1878 = vmatprep.subr.mxu0 0.0
    %1879 = vmatpush1.msra.mxu0 %v112
    %1880 = vmatprep.subr.mxu0 0.0
    %1881 = vmatpush1.msra.mxu0 %v113
    %1882 = vmatprep.subr.mxu0 0.0
    %1883 = vmatpush1.msra.mxu0 %v114
    %1884 = vmatprep.subr.mxu0 0.0
    %1885 = vmatpush1.msra.mxu0 %v115
    %1886 = vmatprep.subr.mxu0 0.0
    %1887 = vmatpush1.msra.mxu0 %v116
    %1888 = vmatprep.subr.mxu0 0.0
    %1889 = vmatpush1.msra.mxu0 0.0
    %1890 = vmatprep.subr.mxu0 0.0
    %1891 = vmatpush1.msra.mxu0 0.0
    %1892 = vmatprep.subr.mxu0 0.0
    %1893 = vmatpush1.msra.mxu0 0.0
    %1894 = vmatprep.subr.mxu0 0.0
    %1895 = vmatpush1.msra.mxu0 0.0
    %1896 = vmatprep.subr.mxu0 0.0
    %1897 = vmatpush1.msra.mxu0 0.0
    %1898 = vmatprep.subr.mxu0 0.0
    %1899 = vmatpush1.msra.mxu0 0.0
    %1900 = vmatprep.subr.mxu0 0.0
    %1901 = vmatpush1.msra.mxu0 0.0
    %1902 = vmatprep.subr.mxu0 0.0
    %1903 = vmatpush1.msra.mxu0 0.0
    %1904 = vmatprep.subr.mxu0 0.0
    %1905 = vmatpush1.msra.mxu0 0.0
    %1906 = vmatprep.subr.mxu0 0.0
    %1907 = vmatpush1.msra.mxu0 0.0
    %1908 = vmatprep.subr.mxu0 0.0
    %1909 = vmatpush1.msra.mxu0 0.0
    %1910 = vmatprep.subr.mxu0 0.0
    %1911 = vmatpush1.msra.mxu0 0.0
    %1912 = vmatprep.subr.mxu0 0.0
    %1913 = vmatpush1.msra.mxu0 0.0
    %1914 = vmatprep.subr.mxu0 0.0
    %1915 = vmatpush1.msra.mxu0 0.0
    %1916 = vmatprep.subr.mxu0 0.0
    %1917 = vmatpush1.msra.mxu0 0.0
    %1918 = vmatprep.subr.mxu0 0.0
    %1919 = vmatpush1.msra.mxu0 0.0
    %1920 = vmatprep.subr.mxu0 0.0
    %1921 = vmatpush1.msra.mxu0 0.0
    %1922 = vmatprep.subr.mxu0 0.0
    %1923 = vmatpush1.msra.mxu0 0.0
    %1924 = vmatprep.subr.mxu0 0.0
    %1925 = vmatpush1.msra.mxu0 0.0
    %1926 = vmatprep.subr.mxu0 0.0
    %1927 = vmatpush1.msra.mxu0 0.0
    %1928 = vmatprep.subr.mxu0 0.0
    %1929 = vmatpush1.msra.mxu0 0.0
    %1930 = vmatprep.subr.mxu0 0.0
    %1931 = vmatpush1.msra.mxu0 0.0
    %1932 = vmatprep.subr.mxu0 0.0
    %1933 = vmatpush1.msra.mxu0 0.0
    %1934 = vmatprep.subr.mxu0 0.0
    %1935 = vmatpush1.msra.mxu0 0.0
    %1936 = vmatprep.mubr.f32.mxu0 0.0
    %1937 = vmatmul.mubr.f32.gmra.mrb[0].mxu0 %v1867
    %v1938 = vpop.f32.mrb[0].mxu0
    %v1939 = vadd.f32 %v1865, %v1938
    %v1940 = vpop.f32.mrb[0].mxu0
    %1941 = vmatprep.mubr.f32.mxu0 0.0
    %1942 = vmatmul.mubr.f32.gmra.mrb[0].mxu0 %v1870
    %v1943 = vpop.f32.mrb[0].mxu0
    %v1944 = vadd.f32 %v1865, %v1943
    %v1945 = vpop.f32.mrb[0].mxu0
    %1946 = vdwg.mxu0
    %v1947 = vadd.f32 %v1939, %v32
    %v1948 = vadd.f32 %v1944, %v33
    %v1949 = vsel %vm123, %v1947, 0.0
    %1950 = vadd.xlane.f32.xlu0 %v1949
    %v1951 = vpop.xlane.xlu0 %1950
    %v1952 = vsel %vm123, %v1948, 0.0
    %1953 = vadd.xlane.f32.xlu0 %v1952
    %v1954 = vpop.xlane.xlu0 %1953
    %v1955 = vrcp.pop 64.0
    %v1956 = vmul.f32 %v1951, %v1955
    %v1957 = vmul.f32 %v1954, %v1955
    %v1958 = vsub.f32 %v1947, %v1956
    %v1959 = vsub.f32 %v1948, %v1957
    %v1960 = vmul.f32 %v1958, %v1958
    %v1961 = vmul.f32 %v1959, %v1959
    %v1962 = vsel %vm123, %v1960, 0.0
    %1963 = vadd.xlane.f32.xlu0 %v1962
    %v1964 = vpop.xlane.xlu0 %1963
    %v1965 = vsel %vm123, %v1961, 0.0
    %1966 = vadd.xlane.f32.xlu0 %v1965
    %v1967 = vpop.xlane.xlu0 %1966
    %v1968 = vmul.f32 %v1964, %v1955
    %v1969 = vmul.f32 %v1967, %v1955
    %v1970 = vadd.f32 %v1968, 1e-05
    %v1971 = vadd.f32 %v1969, 1e-05
    %v1972 = vrsqrt.pop %v1970
    %v1973 = vrsqrt.pop %v1971
    %v1974 = vmul.f32 %v1958, %v1972
    %v1975 = vmul.f32 %v1959, %v1973
    %v1976 = vlaneseq
    %v1977 = vshrl.u32 %v1976, 7
    %v1978 = vsub.s32 4, %v1977
    %v1979 = vrot.slane %v118, %v1978
    %v1980 = vmul.f32 %v1974, %v1979
    %v1981 = vmul.f32 %v1975, %v1979
    %v1982 = vlaneseq
    %v1983 = vshrl.u32 %v1982, 7
    %v1984 = vsub.s32 5, %v1983
    %v1985 = vrot.slane %v118, %v1984
    %v1986 = vadd.f32 %v1980, %v1985
    %v1987 = vadd.f32 %v1981, %v1985
    %1988 = vst.msk [vmem:[#allocation2] sm:$0xff] %vm123, %v1986
    %1989 = vst.msk [vmem:[#allocation2 + $0x8] sm:$0xff] %vm123, %v1987
    // Predicated region
    $region34: #{graph_attention_forward.1} parent=1 // pred_check
      _
    $region35: #{graph_attention_forward.1} parent=1 // pred_check_branch
      %1991 = sbr.rel (0) target = $region37
    $region36: #{graph_attention_forward.1} parent=1 // pred_region
      %s1993 = ssub.s32 256, 256
      %1994 = vsyncadd [#allocation3], %s1993
      %s1995 = sshll.u32 [#allocation2], 4
      %s1996 = int_to_ptr.vmem [resolvable:$true] %s1995
      %2001 = dma.vmem_to_hbm [thread:$0]  %s1996, 256, %s8, [#allocation3], 128, 128, 8
    $region37: #{graph_attention_forward.1} parent=1 // pred_fallthru
      _
    // Predicated region
    $region38: #{graph_attention_forward.1} parent=1 // pred_check
      _
    $region39: #{graph_attention_forward.1} parent=1 // pred_check_branch
      %2003 = sbr.rel (0) target = $region41
    $region40: #{graph_attention_forward.1} parent=1 // pred_region
      _
    $region41: #{graph_attention_forward.1} parent=1 // pred_fallthru
      _
    // Predicated region
    $region42: #{graph_attention_forward.1} parent=1 // pred_check
      _
    $region43: #{graph_attention_forward.1} parent=1 // pred_check_branch
      %2005 = sbr.rel (0) target = $region45
    $region44: #{graph_attention_forward.1} parent=1 // pred_region
      %2006 = dma.done [#allocation3], 256
    $region45: #{graph_attention_forward.1} parent=1 // pred_fallthru
      _
    // Predicated region
    $region46: #{graph_attention_forward.1} parent=1 // pred_check
      _
    $region47: #{graph_attention_forward.1} parent=1 // pred_check_branch
      %2008 = sbr.rel (0) target = $region49
    $region48: #{graph_attention_forward.1} parent=1 // pred_region
      _
    $region49: #{graph_attention_forward.1} parent=1 // pred_fallthru
      _
    %2009 = vsyncpa [#allocation3], 1

</llo_original>
